<compile_context>
chip_gen: v6e
topology: v6e:2x2x1
jax: 0.10.0
libtpu: 0.0.40
codegen_flags: <defaults>
</compile_context>

<pallas_src>
import jax
import jax.numpy as jnp
from jax.experimental import pallas as pl
from jax.experimental.pallas import tpu as pltpu


def _mish(x):
    # Mish(x) = x * tanh(softplus(x)) = x * (1 - 2 / ((1 + e^x)^2 + 1))
    # One exp (EUP) + one approximate reciprocal (EUP).  Clamp the exp argument so
    # huge (or garbage padded-lane) inputs never overflow to inf; for x > 20 the
    # correction term is ~1e-17 so Mish(x) == x to f32 precision.
    e = jnp.exp(jnp.minimum(x, 20.0))
    t = 1.0 + e
    return x * (1.0 - 2.0 * pl.reciprocal(t * t + 1.0, approx=True))


def mlp_kernel(x_ref, we_ref, be_ref, wh_ref, bh_ref, wd_ref, bd_ref, y_ref):
    # Feature-major: x_ref is (in_dims, tb), weights are PyTorch-native (out, in).
    # Encoder: (hid, in) @ (in, tb) -> (hid, tb), bf16 operands, f32 accumulate.
    z = jnp.dot(we_ref[...], x_ref[...],
                preferred_element_type=jnp.float32) + be_ref[...]

    # Hidden residual blocks, statically unrolled (small depth): Z = Mish(W @ Z + b) + Z
    depth = wh_ref.shape[0]
    for d in range(depth):  # static Python unroll -> static slices wh_ref[d]
        h = jnp.dot(wh_ref[d], z.astype(jnp.bfloat16),
                    preferred_element_type=jnp.float32) + bh_ref[d]
        z = _mish(h) + z

    # Decoder: (out, hid) @ (hid, tb) -> (out, tb); tb is a multiple of 128 -> unmasked vst.
    y = jnp.dot(wd_ref[...], z.astype(jnp.bfloat16),
                preferred_element_type=jnp.float32) + bd_ref[...]
    y_ref[...] = y.astype(y_ref.dtype)


def _pick_block_b(B, block_b):
    if block_b is not None:
        return min(block_b, B)
    if B <= 256:
        return B
    # Largest tile <= 1024 columns that still leaves >= 2 grid steps (keeps both v7x
    # TensorCores busy); rounded down to a multiple of 128 for lane-dense stores.
    tb = min(1024, B // 2)
    return max(128, (tb // 128) * 128)


def mlp_forward(x, w_enc, b_enc, w_hid, b_hid, w_dec, b_dec, *, block_b=None):
    """x: (B, in_dims); weights in native PyTorch layout:
       w_enc (hid, in), b_enc (hid,), w_hid (depth, hid, hid), b_hid (depth, hid),
       w_dec (out, hid), b_dec (out,).  Returns (B, out_dims) float32."""
    B, in_dims = x.shape
    out_dims, hid_dims = w_dec.shape

    # bf16 matmul operands; biases stay f32 (added after the f32 accumulation).
    x_fm = x.astype(jnp.bfloat16).T                      # (in_dims, B), batch on lanes
    w_enc = w_enc.astype(jnp.bfloat16)
    w_hid = w_hid.astype(jnp.bfloat16)
    w_dec = w_dec.astype(jnp.bfloat16)
    b_enc_c = b_enc.astype(jnp.float32)[:, None]         # (hid, 1)
    b_hid_c = b_hid.astype(jnp.float32)[:, :, None]      # (depth, hid, 1)
    b_dec_c = b_dec.astype(jnp.float32)[:, None]         # (out, 1)

    tb = _pick_block_b(B, block_b)
    grid = (pl.cdiv(B, tb),)

    def resident(a):
        # Same block for every grid step -> stays VMEM-resident (no re-DMA).
        nd = a.ndim
        return pl.BlockSpec(a.shape, lambda i, _nd=nd: (0,) * _nd)

    y_fm = pl.pallas_call(
        mlp_kernel,
        out_shape=jax.ShapeDtypeStruct((out_dims, B), jnp.float32),
        grid=grid,
        in_specs=[
            pl.BlockSpec((in_dims, tb), lambda i: (0, i)),   # x: tiled over batch (lanes)
            resident(w_enc), resident(b_enc_c),
            resident(w_hid), resident(b_hid_c),
            resident(w_dec), resident(b_dec_c),
        ],
        out_specs=pl.BlockSpec((out_dims, tb), lambda i: (0, i)),
        compiler_params=pltpu.CompilerParams(
            dimension_semantics=("parallel",),
        ),
    )(x_fm, w_enc, b_enc_c, w_hid, b_hid_c, w_dec, b_dec_c)

    return y_fm.T                                         # back to (B, out_dims)


def mlp_reference(x, w_enc, b_enc, w_hid, b_hid, w_dec, b_dec):
    # Exact f32 reference in PyTorch (batch-major) convention: y = x @ W.T + b.
    z = x @ w_enc.T + b_enc
    for d in range(w_hid.shape[0]):
        h = z @ w_hid[d].T + b_hid[d]
        z = h * jnp.tanh(jax.nn.softplus(h)) + z
    return z @ w_dec.T + b_dec


if __name__ == "__main__":
    # Small shapes consistent with the module: in_dims=16, width=None -> hid=3*16=48.
    # batch=512 so the batch grid has 2 lane-dense (256-column) tiles.
    batch, in_dims, out_dims, depth = 512, 16, 8, 4
    hid_dims = 3 * in_dims  # width=None default in the PyTorch module

    key = jax.random.PRNGKey(0)
    ks = jax.random.split(key, 8)
    scale = 0.1

    x = jax.random.normal(ks[0], (batch, in_dims), jnp.float32)

    # Parameters in native PyTorch layout: weight (out_features, in_features), bias (out,)
    w_enc = jax.random.normal(ks[1], (hid_dims, in_dims), jnp.float32) * scale
    b_enc = jax.random.normal(ks[2], (hid_dims,), jnp.float32) * scale
    w_hid = jax.random.normal(ks[3], (depth, hid_dims, hid_dims), jnp.float32) * scale
    b_hid = jax.random.normal(ks[4], (depth, hid_dims), jnp.float32) * scale
    w_dec = jax.random.normal(ks[5], (out_dims, hid_dims), jnp.float32) * scale
    b_dec = jax.random.normal(ks[6], (out_dims,), jnp.float32) * scale

    y = mlp_forward(x, w_enc, b_enc, w_hid, b_hid, w_dec, b_dec)
    y = jax.block_until_ready(y)

    y_ref = mlp_reference(x, w_enc, b_enc, w_hid, b_hid, w_dec, b_dec)
    # Tolerance loosened for bf16 matmul operands + approx reciprocal in Mish.
    assert y.shape == (batch, out_dims)
    assert jnp.allclose(y, y_ref, atol=2e-2, rtol=2e-2), "mismatch vs reference"

    print("KERNEL_OK")
</pallas_src>

<mosaic_0001>
module attributes {stable_mosaic.version = 11 : i64} {
  func.func @mlp_kernel(%arg0: i32, %arg1: memref<16x256xbf16, #tpu.memory_space<vmem>>, %arg2: memref<48x16xbf16, #tpu.memory_space<vmem>>, %arg3: memref<48x1xf32, #tpu.memory_space<vmem>>, %arg4: memref<4x48x48xbf16, #tpu.memory_space<vmem>>, %arg5: memref<4x48x1xf32, #tpu.memory_space<vmem>>, %arg6: memref<8x48xbf16, #tpu.memory_space<vmem>>, %arg7: memref<8x1xf32, #tpu.memory_space<vmem>>, %arg8: memref<8x256xf32, #tpu.memory_space<vmem>>) attributes {dimension_semantics = [#tpu.dimension_semantics<parallel>], iteration_bounds = array<i64: 2>, scalar_prefetch = 0 : i64, scratch_operands = 0 : i64, tpu.core_type = #tpu.core_type<tc>, window_params = [{transform_indices = @transform_0, window_bounds = array<i64: 16, 256>}, {pipeline_mode = #tpu.pipeline_mode<synchronous>, transform_indices = @transform_1, window_bounds = array<i64: 48, 16>}, {pipeline_mode = #tpu.pipeline_mode<synchronous>, transform_indices = @transform_2, window_bounds = array<i64: 48, 1>}, {pipeline_mode = #tpu.pipeline_mode<synchronous>, transform_indices = @transform_3, window_bounds = array<i64: 4, 48, 48>}, {pipeline_mode = #tpu.pipeline_mode<synchronous>, transform_indices = @transform_4, window_bounds = array<i64: 4, 48, 1>}, {pipeline_mode = #tpu.pipeline_mode<synchronous>, transform_indices = @transform_5, window_bounds = array<i64: 8, 48>}, {pipeline_mode = #tpu.pipeline_mode<synchronous>, transform_indices = @transform_6, window_bounds = array<i64: 8, 1>}, {transform_indices = @transform_7, window_bounds = array<i64: 8, 256>}]} {
    %c0 = arith.constant 0 : index
    %c0_0 = arith.constant 0 : index
    %0 = vector.load %arg2[%c0, %c0_0] : memref<48x16xbf16, #tpu.memory_space<vmem>>, vector<48x16xbf16>
    %c0_1 = arith.constant 0 : index
    %c0_2 = arith.constant 0 : index
    %1 = vector.load %arg1[%c0_1, %c0_2] : memref<16x256xbf16, #tpu.memory_space<vmem>>, vector<16x256xbf16>
    %cst = arith.constant dense<0.000000e+00> : vector<48x256xf32>
    %2 = tpu.matmul %0, %1, %cst {dimension_numbers = #tpu.dot_dimension_numbers<[1], [0], [0], [1], [0, 0, 1, 1], [], []>} : vector<48x16xbf16>, vector<16x256xbf16>, vector<48x256xf32> -> vector<48x256xf32>
    %c0_3 = arith.constant 0 : index
    %c0_4 = arith.constant 0 : index
    %3 = vector.load %arg3[%c0_3, %c0_4] : memref<48x1xf32, #tpu.memory_space<vmem>>, vector<48x1xf32>
    %4 = vector.broadcast %3 : vector<48x1xf32> to vector<48x256xf32>
    %5 = arith.addf %2, %4 : vector<48x256xf32>
    %c0_5 = arith.constant 0 : index
    %c0_6 = arith.constant 0 : index
    %c0_7 = arith.constant 0 : index
    %6 = vector.load %arg4[%c0_5, %c0_6, %c0_7] : memref<4x48x48xbf16, #tpu.memory_space<vmem>>, vector<1x48x48xbf16>
    %7 = vector.shape_cast %6 : vector<1x48x48xbf16> to vector<48x48xbf16>
    %8 = arith.truncf %5 : vector<48x256xf32> to vector<48x256xbf16>
    %cst_8 = arith.constant dense<0.000000e+00> : vector<48x256xf32>
    %9 = tpu.matmul %7, %8, %cst_8 {dimension_numbers = #tpu.dot_dimension_numbers<[1], [0], [0], [1], [0, 0, 1, 1], [], []>} : vector<48x48xbf16>, vector<48x256xbf16>, vector<48x256xf32> -> vector<48x256xf32>
    %c0_9 = arith.constant 0 : index
    %c0_10 = arith.constant 0 : index
    %c0_11 = arith.constant 0 : index
    %10 = vector.load %arg5[%c0_9, %c0_10, %c0_11] : memref<4x48x1xf32, #tpu.memory_space<vmem>>, vector<1x48x1xf32>
    %11 = vector.shape_cast %10 : vector<1x48x1xf32> to vector<48x1xf32>
    %12 = vector.broadcast %11 : vector<48x1xf32> to vector<48x256xf32>
    %13 = arith.addf %9, %12 : vector<48x256xf32>
    %cst_12 = arith.constant 2.000000e+01 : f32
    %14 = vector.broadcast %cst_12 : f32 to vector<48x256xf32>
    %15 = arith.minimumf %13, %14 : vector<48x256xf32>
    %16 = math.exp %15 : vector<48x256xf32>
    %cst_13 = arith.constant 1.000000e+00 : f32
    %17 = vector.broadcast %cst_13 : f32 to vector<48x256xf32>
    %18 = arith.addf %17, %16 : vector<48x256xf32>
    %19 = arith.mulf %18, %18 : vector<48x256xf32>
    %cst_14 = arith.constant 1.000000e+00 : f32
    %20 = vector.broadcast %cst_14 : f32 to vector<48x256xf32>
    %21 = arith.addf %19, %20 : vector<48x256xf32>
    %22 = tpu.reciprocal %21 {approx = true} : vector<48x256xf32> -> vector<48x256xf32>
    %cst_15 = arith.constant 2.000000e+00 : f32
    %23 = vector.broadcast %cst_15 : f32 to vector<48x256xf32>
    %24 = arith.mulf %23, %22 : vector<48x256xf32>
    %cst_16 = arith.constant 1.000000e+00 : f32
    %25 = vector.broadcast %cst_16 : f32 to vector<48x256xf32>
    %26 = arith.subf %25, %24 : vector<48x256xf32>
    %27 = arith.mulf %13, %26 : vector<48x256xf32>
    %28 = arith.addf %27, %5 : vector<48x256xf32>
    %c1 = arith.constant 1 : index
    %c0_17 = arith.constant 0 : index
    %c0_18 = arith.constant 0 : index
    %29 = vector.load %arg4[%c1, %c0_17, %c0_18] : memref<4x48x48xbf16, #tpu.memory_space<vmem>>, vector<1x48x48xbf16>
    %30 = vector.shape_cast %29 : vector<1x48x48xbf16> to vector<48x48xbf16>
    %31 = arith.truncf %28 : vector<48x256xf32> to vector<48x256xbf16>
    %cst_19 = arith.constant dense<0.000000e+00> : vector<48x256xf32>
    %32 = tpu.matmul %30, %31, %cst_19 {dimension_numbers = #tpu.dot_dimension_numbers<[1], [0], [0], [1], [0, 0, 1, 1], [], []>} : vector<48x48xbf16>, vector<48x256xbf16>, vector<48x256xf32> -> vector<48x256xf32>
    %c1_20 = arith.constant 1 : index
    %c0_21 = arith.constant 0 : index
    %c0_22 = arith.constant 0 : index
    %33 = vector.load %arg5[%c1_20, %c0_21, %c0_22] : memref<4x48x1xf32, #tpu.memory_space<vmem>>, vector<1x48x1xf32>
    %34 = vector.shape_cast %33 : vector<1x48x1xf32> to vector<48x1xf32>
    %35 = vector.broadcast %34 : vector<48x1xf32> to vector<48x256xf32>
    %36 = arith.addf %32, %35 : vector<48x256xf32>
    %cst_23 = arith.constant 2.000000e+01 : f32
    %37 = vector.broadcast %cst_23 : f32 to vector<48x256xf32>
    %38 = arith.minimumf %36, %37 : vector<48x256xf32>
    %39 = math.exp %38 : vector<48x256xf32>
    %cst_24 = arith.constant 1.000000e+00 : f32
    %40 = vector.broadcast %cst_24 : f32 to vector<48x256xf32>
    %41 = arith.addf %40, %39 : vector<48x256xf32>
    %42 = arith.mulf %41, %41 : vector<48x256xf32>
    %cst_25 = arith.constant 1.000000e+00 : f32
    %43 = vector.broadcast %cst_25 : f32 to vector<48x256xf32>
    %44 = arith.addf %42, %43 : vector<48x256xf32>
    %45 = tpu.reciprocal %44 {approx = true} : vector<48x256xf32> -> vector<48x256xf32>
    %cst_26 = arith.constant 2.000000e+00 : f32
    %46 = vector.broadcast %cst_26 : f32 to vector<48x256xf32>
    %47 = arith.mulf %46, %45 : vector<48x256xf32>
    %cst_27 = arith.constant 1.000000e+00 : f32
    %48 = vector.broadcast %cst_27 : f32 to vector<48x256xf32>
    %49 = arith.subf %48, %47 : vector<48x256xf32>
    %50 = arith.mulf %36, %49 : vector<48x256xf32>
    %51 = arith.addf %50, %28 : vector<48x256xf32>
    %c2 = arith.constant 2 : index
    %c0_28 = arith.constant 0 : index
    %c0_29 = arith.constant 0 : index
    %52 = vector.load %arg4[%c2, %c0_28, %c0_29] : memref<4x48x48xbf16, #tpu.memory_space<vmem>>, vector<1x48x48xbf16>
    %53 = vector.shape_cast %52 : vector<1x48x48xbf16> to vector<48x48xbf16>
    %54 = arith.truncf %51 : vector<48x256xf32> to vector<48x256xbf16>
    %cst_30 = arith.constant dense<0.000000e+00> : vector<48x256xf32>
    %55 = tpu.matmul %53, %54, %cst_30 {dimension_numbers = #tpu.dot_dimension_numbers<[1], [0], [0], [1], [0, 0, 1, 1], [], []>} : vector<48x48xbf16>, vector<48x256xbf16>, vector<48x256xf32> -> vector<48x256xf32>
    %c2_31 = arith.constant 2 : index
    %c0_32 = arith.constant 0 : index
    %c0_33 = arith.constant 0 : index
    %56 = vector.load %arg5[%c2_31, %c0_32, %c0_33] : memref<4x48x1xf32, #tpu.memory_space<vmem>>, vector<1x48x1xf32>
    %57 = vector.shape_cast %56 : vector<1x48x1xf32> to vector<48x1xf32>
    %58 = vector.broadcast %57 : vector<48x1xf32> to vector<48x256xf32>
    %59 = arith.addf %55, %58 : vector<48x256xf32>
    %cst_34 = arith.constant 2.000000e+01 : f32
    %60 = vector.broadcast %cst_34 : f32 to vector<48x256xf32>
    %61 = arith.minimumf %59, %60 : vector<48x256xf32>
    %62 = math.exp %61 : vector<48x256xf32>
    %cst_35 = arith.constant 1.000000e+00 : f32
    %63 = vector.broadcast %cst_35 : f32 to vector<48x256xf32>
    %64 = arith.addf %63, %62 : vector<48x256xf32>
    %65 = arith.mulf %64, %64 : vector<48x256xf32>
    %cst_36 = arith.constant 1.000000e+00 : f32
    %66 = vector.broadcast %cst_36 : f32 to vector<48x256xf32>
    %67 = arith.addf %65, %66 : vector<48x256xf32>
    %68 = tpu.reciprocal %67 {approx = true} : vector<48x256xf32> -> vector<48x256xf32>
    %cst_37 = arith.constant 2.000000e+00 : f32
    %69 = vector.broadcast %cst_37 : f32 to vector<48x256xf32>
    %70 = arith.mulf %69, %68 : vector<48x256xf32>
    %cst_38 = arith.constant 1.000000e+00 : f32
    %71 = vector.broadcast %cst_38 : f32 to vector<48x256xf32>
    %72 = arith.subf %71, %70 : vector<48x256xf32>
    %73 = arith.mulf %59, %72 : vector<48x256xf32>
    %74 = arith.addf %73, %51 : vector<48x256xf32>
    %c3 = arith.constant 3 : index
    %c0_39 = arith.constant 0 : index
    %c0_40 = arith.constant 0 : index
    %75 = vector.load %arg4[%c3, %c0_39, %c0_40] : memref<4x48x48xbf16, #tpu.memory_space<vmem>>, vector<1x48x48xbf16>
    %76 = vector.shape_cast %75 : vector<1x48x48xbf16> to vector<48x48xbf16>
    %77 = arith.truncf %74 : vector<48x256xf32> to vector<48x256xbf16>
    %cst_41 = arith.constant dense<0.000000e+00> : vector<48x256xf32>
    %78 = tpu.matmul %76, %77, %cst_41 {dimension_numbers = #tpu.dot_dimension_numbers<[1], [0], [0], [1], [0, 0, 1, 1], [], []>} : vector<48x48xbf16>, vector<48x256xbf16>, vector<48x256xf32> -> vector<48x256xf32>
    %c3_42 = arith.constant 3 : index
    %c0_43 = arith.constant 0 : index
    %c0_44 = arith.constant 0 : index
    %79 = vector.load %arg5[%c3_42, %c0_43, %c0_44] : memref<4x48x1xf32, #tpu.memory_space<vmem>>, vector<1x48x1xf32>
    %80 = vector.shape_cast %79 : vector<1x48x1xf32> to vector<48x1xf32>
    %81 = vector.broadcast %80 : vector<48x1xf32> to vector<48x256xf32>
    %82 = arith.addf %78, %81 : vector<48x256xf32>
    %cst_45 = arith.constant 2.000000e+01 : f32
    %83 = vector.broadcast %cst_45 : f32 to vector<48x256xf32>
    %84 = arith.minimumf %82, %83 : vector<48x256xf32>
    %85 = math.exp %84 : vector<48x256xf32>
    %cst_46 = arith.constant 1.000000e+00 : f32
    %86 = vector.broadcast %cst_46 : f32 to vector<48x256xf32>
    %87 = arith.addf %86, %85 : vector<48x256xf32>
    %88 = arith.mulf %87, %87 : vector<48x256xf32>
    %cst_47 = arith.constant 1.000000e+00 : f32
    %89 = vector.broadcast %cst_47 : f32 to vector<48x256xf32>
    %90 = arith.addf %88, %89 : vector<48x256xf32>
    %91 = tpu.reciprocal %90 {approx = true} : vector<48x256xf32> -> vector<48x256xf32>
    %cst_48 = arith.constant 2.000000e+00 : f32
    %92 = vector.broadcast %cst_48 : f32 to vector<48x256xf32>
    %93 = arith.mulf %92, %91 : vector<48x256xf32>
    %cst_49 = arith.constant 1.000000e+00 : f32
    %94 = vector.broadcast %cst_49 : f32 to vector<48x256xf32>
    %95 = arith.subf %94, %93 : vector<48x256xf32>
    %96 = arith.mulf %82, %95 : vector<48x256xf32>
    %97 = arith.addf %96, %74 : vector<48x256xf32>
    %c0_50 = arith.constant 0 : index
    %c0_51 = arith.constant 0 : index
    %98 = vector.load %arg6[%c0_50, %c0_51] : memref<8x48xbf16, #tpu.memory_space<vmem>>, vector<8x48xbf16>
    %99 = arith.truncf %97 : vector<48x256xf32> to vector<48x256xbf16>
    %cst_52 = arith.constant dense<0.000000e+00> : vector<8x256xf32>
    %100 = tpu.matmul %98, %99, %cst_52 {dimension_numbers = #tpu.dot_dimension_numbers<[1], [0], [0], [1], [0, 0, 1, 1], [], []>} : vector<8x48xbf16>, vector<48x256xbf16>, vector<8x256xf32> -> vector<8x256xf32>
    %c0_53 = arith.constant 0 : index
    %c0_54 = arith.constant 0 : index
    %101 = vector.load %arg7[%c0_53, %c0_54] : memref<8x1xf32, #tpu.memory_space<vmem>>, vector<8x1xf32>
    %102 = vector.broadcast %101 : vector<8x1xf32> to vector<8x256xf32>
    %103 = arith.addf %100, %102 : vector<8x256xf32>
    %c0_55 = arith.constant 0 : index
    %c0_56 = arith.constant 0 : index
    %104 = vector.load %arg8[%c0_55, %c0_56] : memref<8x256xf32, #tpu.memory_space<vmem>>, vector<8x256xf32>
    tpu.vector_store %arg8[%c0_55, %c0_56], %103 {strides = array<i32>} : memref<8x256xf32, #tpu.memory_space<vmem>>, vector<8x256xf32>,
    return
  }
  func.func @transform_0(%arg0: i32) -> (i32, i32) {
    %c0_i32 = arith.constant 0 : i32
    %c0_i32_0 = arith.constant 0 : i32
    return %c0_i32, %arg0 : i32, i32
  }
  func.func @transform_1(%arg0: i32) -> (i32, i32) {
    %c0_i32 = arith.constant 0 : i32
    %c0_i32_0 = arith.constant 0 : i32
    %c0_i32_1 = arith.constant 0 : i32
    return %c0_i32, %c0_i32_0 : i32, i32
  }
  func.func @transform_2(%arg0: i32) -> (i32, i32) {
    %c0_i32 = arith.constant 0 : i32
    %c0_i32_0 = arith.constant 0 : i32
    %c0_i32_1 = arith.constant 0 : i32
    return %c0_i32, %c0_i32_0 : i32, i32
  }
  func.func @transform_3(%arg0: i32) -> (i32, i32, i32) {
    %c0_i32 = arith.constant 0 : i32
    %c0_i32_0 = arith.constant 0 : i32
    %c0_i32_1 = arith.constant 0 : i32
    %c0_i32_2 = arith.constant 0 : i32
    return %c0_i32, %c0_i32_0, %c0_i32_1 : i32, i32, i32
  }
  func.func @transform_4(%arg0: i32) -> (i32, i32, i32) {
    %c0_i32 = arith.constant 0 : i32
    %c0_i32_0 = arith.constant 0 : i32
    %c0_i32_1 = arith.constant 0 : i32
    %c0_i32_2 = arith.constant 0 : i32
    return %c0_i32, %c0_i32_0, %c0_i32_1 : i32, i32, i32
  }
  func.func @transform_5(%arg0: i32) -> (i32, i32) {
    %c0_i32 = arith.constant 0 : i32
    %c0_i32_0 = arith.constant 0 : i32
    %c0_i32_1 = arith.constant 0 : i32
    return %c0_i32, %c0_i32_0 : i32, i32
  }
  func.func @transform_6(%arg0: i32) -> (i32, i32) {
    %c0_i32 = arith.constant 0 : i32
    %c0_i32_0 = arith.constant 0 : i32
    %c0_i32_1 = arith.constant 0 : i32
    return %c0_i32, %c0_i32_0 : i32, i32
  }
  func.func @transform_7(%arg0: i32) -> (i32, i32) {
    %c0_i32 = arith.constant 0 : i32
    %c0_i32_0 = arith.constant 0 : i32
    return %c0_i32, %arg0 : i32, i32
  }
}

</mosaic_0001>

<llo_original>
// kernel: tpu_custom_call.1
$region0: #{tpu_custom_call.1}
  #allocation0 [shape = 'u32[]', space=smem, size = 0x4, offset = 0x4, fixed_abs, tag = 'smem constant byte address 0x4 - core index']
  #allocation1 [shape = 'u32[144,128]{1,0:T(1,128)}', space=vmem, size = 0x12000, scoped, tag = 'internal scratch']
  %s0 = inlined_call_operand.vmem [shape: bf16[16,512], index: 0, kind: input, shape index: {}]
  %s1 = inlined_call_operand.vmem [shape: bf16[48,16], index: 1, kind: input, shape index: {}]
  %s2 = inlined_call_operand.vmem [shape: f32[48,1], index: 2, kind: input, shape index: {}]
  %s3 = inlined_call_operand.vmem [shape: bf16[4,48,48], index: 3, kind: input, shape index: {}]
  %s4 = inlined_call_operand.vmem [shape: f32[4,48,1], index: 4, kind: input, shape index: {}]
  %s5 = inlined_call_operand.vmem [shape: bf16[8,48], index: 5, kind: input, shape index: {}]
  %s6 = inlined_call_operand.vmem [shape: f32[8,1], index: 6, kind: input, shape index: {}]
  %s7 = inlined_call_operand.hbm [shape: f32[8,512], index: 7, kind: output, shape index: {}]
  %s8 = sld [smem:[#allocation0]]
  $region99: #{tpu_custom_call.1} parent=0
    _
  %s10 = ssub.s32 1, %s8
  %s11 = scalar_select 0, %s10, %s8
  $region1: #{tpu_custom_call.1} parent=0
    #allocation2 [shape = 'u8[16384]{0}', space=vmem, size = 0x4000, scoped, tag = 'input window, operand 0']
    #allocation3 [shape = 'u8[16384]{0}', space=vmem, size = 0x4000, scoped, tag = 'output window, operand 0']
    #allocation4 [shape = 's32[2]{0}', space=sflag, size = 0x8, scoped, tag = 'scoped memory for tpu_custom_call.1']
    %12 = vsyncpa [#allocation4], 0
    %s13 = scalar_lea.sflag [#allocation4], 1
    %14 = vsyncpa %s13, 0
    loop: start=0, step=1, limit=4
    $region2: #{tpu_custom_call.1} parent=1 // loop_pre_header
      _
    $region3: #{tpu_custom_call.1} parent=1 // loop_header
      %s16 = sphi 0, %s20
      %p17 = scmp.ge.s32.totalorder %s16, 4
      %s26 = sphi 0, %s28
      %s29 = sphi 0, %s26
      %s30 = sphi 0, %s29
      %s46 = sphi 0, %s30
      %s50 = sphi 0, %s50
      %s52 = sphi 0, %s50
      %s53 = sphi 0, %s52
      %s67 = sphi 0, %s53
      %s71 = sphi 0, %s71
      %s73 = sphi 0, %s71
      %s74 = sphi 0, %s73
      %s88 = sphi 0, %s74
      %s92 = sphi 0, %s92
      %s94 = sphi 0, %s92
      %s95 = sphi 0, %s94
      %s109 = sphi 0, %s95
      %s113 = sphi 0, %s113
      %s115 = sphi 0, %s113
      %s116 = sphi 0, %s115
      %s130 = sphi 0, %s116
      %s134 = sphi 0, %s134
      %s136 = sphi 0, %s134
      %s137 = sphi 0, %s136
      %s151 = sphi 0, %s137
      %s155 = sphi 0, %s155
      %s157 = sphi 0, %s155
      %s158 = sphi 0, %s157
      %s172 = sphi 0, %s158
      %s178 = sphi 0, %s180
      %s181 = sphi 0, %s178
      %s182 = sphi 0, %s181
      %s198 = sphi 0, %s182
    $region4: #{tpu_custom_call.1} parent=1 // loop_header_branch
      %19 = sbr.rel (%p17) target = $region8
    $region5: #{tpu_custom_call.1} parent=1 // loop_body
      %s21 = ssub.s32 %s16, 1
      %s22 = ssub.s32 %s16, 2
      %s23 = sadd.s32 %s16, 1
      %s24 = ssub.s32 %s16, %s23
      %p25 = scmp.eq.s32.totalorder %s24, 0
      %s27 = sadd.s32 %s26, 1
      %s28 = scalar_select %p25, %s26, %s27
      %p31 = pneg %p25
      %p32 = scmp.eq.s32.totalorder %s16, 1
      %p33 = por %p31, %p32
      %p34 = scmp.ne.s32.totalorder %s26, %s29
      %p35 = scmp.eq.s32.totalorder %s16, 0
      %p36 = por %p34, %p35
      %p37 = scmp.ne.s32.totalorder %s26, %s29
      %p38 = scmp.eq.s32.totalorder %s21, 1
      %p39 = por %p37, %p38
      %p40 = scmp.ne.s32.totalorder %s29, %s30
      %p41 = scmp.eq.s32.totalorder %s21, 0
      %p42 = por %p40, %p41
      %p43 = scmp.ne.s32.totalorder %s29, %s30
      %p44 = scmp.eq.s32.totalorder %s22, 1
      %p45 = por %p43, %p44
      %p47 = scmp.ne.s32.totalorder %s30, %s46
      %p48 = scmp.eq.s32.totalorder %s22, 0
      %p49 = por %p47, %p48
      %s51 = sadd.s32 %s50, 1
      %p54 = scmp.eq.s32.totalorder %s16, 1
      %p55 = scmp.ne.s32.totalorder %s50, %s52
      %p56 = scmp.eq.s32.totalorder %s16, 0
      %p57 = por %p55, %p56
      %p58 = scmp.ne.s32.totalorder %s50, %s52
      %p59 = scmp.eq.s32.totalorder %s21, 1
      %p60 = por %p58, %p59
      %p61 = scmp.ne.s32.totalorder %s52, %s53
      %p62 = scmp.eq.s32.totalorder %s21, 0
      %p63 = por %p61, %p62
      %p64 = scmp.ne.s32.totalorder %s52, %s53
      %p65 = scmp.eq.s32.totalorder %s22, 1
      %p66 = por %p64, %p65
      %p68 = scmp.ne.s32.totalorder %s53, %s67
      %p69 = scmp.eq.s32.totalorder %s22, 0
      %p70 = por %p68, %p69
      %s72 = sadd.s32 %s71, 1
      %p75 = scmp.eq.s32.totalorder %s16, 1
      %p76 = scmp.ne.s32.totalorder %s71, %s73
      %p77 = scmp.eq.s32.totalorder %s16, 0
      %p78 = por %p76, %p77
      %p79 = scmp.ne.s32.totalorder %s71, %s73
      %p80 = scmp.eq.s32.totalorder %s21, 1
      %p81 = por %p79, %p80
      %p82 = scmp.ne.s32.totalorder %s73, %s74
      %p83 = scmp.eq.s32.totalorder %s21, 0
      %p84 = por %p82, %p83
      %p85 = scmp.ne.s32.totalorder %s73, %s74
      %p86 = scmp.eq.s32.totalorder %s22, 1
      %p87 = por %p85, %p86
      %p89 = scmp.ne.s32.totalorder %s74, %s88
      %p90 = scmp.eq.s32.totalorder %s22, 0
      %p91 = por %p89, %p90
      %s93 = sadd.s32 %s92, 1
      %p96 = scmp.eq.s32.totalorder %s16, 1
      %p97 = scmp.ne.s32.totalorder %s92, %s94
      %p98 = scmp.eq.s32.totalorder %s16, 0
      %p99 = por %p97, %p98
      %p100 = scmp.ne.s32.totalorder %s92, %s94
      %p101 = scmp.eq.s32.totalorder %s21, 1
      %p102 = por %p100, %p101
      %p103 = scmp.ne.s32.totalorder %s94, %s95
      %p104 = scmp.eq.s32.totalorder %s21, 0
      %p105 = por %p103, %p104
      %p106 = scmp.ne.s32.totalorder %s94, %s95
      %p107 = scmp.eq.s32.totalorder %s22, 1
      %p108 = por %p106, %p107
      %p110 = scmp.ne.s32.totalorder %s95, %s109
      %p111 = scmp.eq.s32.totalorder %s22, 0
      %p112 = por %p110, %p111
      %s114 = sadd.s32 %s113, 1
      %p117 = scmp.eq.s32.totalorder %s16, 1
      %p118 = scmp.ne.s32.totalorder %s113, %s115
      %p119 = scmp.eq.s32.totalorder %s16, 0
      %p120 = por %p118, %p119
      %p121 = scmp.ne.s32.totalorder %s113, %s115
      %p122 = scmp.eq.s32.totalorder %s21, 1
      %p123 = por %p121, %p122
      %p124 = scmp.ne.s32.totalorder %s115, %s116
      %p125 = scmp.eq.s32.totalorder %s21, 0
      %p126 = por %p124, %p125
      %p127 = scmp.ne.s32.totalorder %s115, %s116
      %p128 = scmp.eq.s32.totalorder %s22, 1
      %p129 = por %p127, %p128
      %p131 = scmp.ne.s32.totalorder %s116, %s130
      %p132 = scmp.eq.s32.totalorder %s22, 0
      %p133 = por %p131, %p132
      %s135 = sadd.s32 %s134, 1
      %p138 = scmp.eq.s32.totalorder %s16, 1
      %p139 = scmp.ne.s32.totalorder %s134, %s136
      %p140 = scmp.eq.s32.totalorder %s16, 0
      %p141 = por %p139, %p140
      %p142 = scmp.ne.s32.totalorder %s134, %s136
      %p143 = scmp.eq.s32.totalorder %s21, 1
      %p144 = por %p142, %p143
      %p145 = scmp.ne.s32.totalorder %s136, %s137
      %p146 = scmp.eq.s32.totalorder %s21, 0
      %p147 = por %p145, %p146
      %p148 = scmp.ne.s32.totalorder %s136, %s137
      %p149 = scmp.eq.s32.totalorder %s22, 1
      %p150 = por %p148, %p149
      %p152 = scmp.ne.s32.totalorder %s137, %s151
      %p153 = scmp.eq.s32.totalorder %s22, 0
      %p154 = por %p152, %p153
      %s156 = sadd.s32 %s155, 1
      %p159 = scmp.eq.s32.totalorder %s16, 1
      %p160 = scmp.ne.s32.totalorder %s155, %s157
      %p161 = scmp.eq.s32.totalorder %s16, 0
      %p162 = por %p160, %p161
      %p163 = scmp.ne.s32.totalorder %s155, %s157
      %p164 = scmp.eq.s32.totalorder %s21, 1
      %p165 = por %p163, %p164
      %p166 = scmp.ne.s32.totalorder %s157, %s158
      %p167 = scmp.eq.s32.totalorder %s21, 0
      %p168 = por %p166, %p167
      %p169 = scmp.ne.s32.totalorder %s157, %s158
      %p170 = scmp.eq.s32.totalorder %s22, 1
      %p171 = por %p169, %p170
      %p173 = scmp.ne.s32.totalorder %s158, %s172
      %p174 = scmp.eq.s32.totalorder %s22, 0
      %p175 = por %p173, %p174
      %s176 = ssub.s32 %s16, %s23
      %p177 = scmp.eq.s32.totalorder %s176, 0
      %s179 = sadd.s32 %s178, 1
      %s180 = scalar_select %p177, %s178, %s179
      %p183 = pneg %p177
      %p184 = scmp.eq.s32.totalorder %s16, 1
      %p185 = por %p183, %p184
      %p186 = scmp.ne.s32.totalorder %s178, %s181
      %p187 = scmp.eq.s32.totalorder %s16, 0
      %p188 = por %p186, %p187
      %p189 = scmp.ne.s32.totalorder %s178, %s181
      %p190 = scmp.eq.s32.totalorder %s21, 1
      %p191 = por %p189, %p190
      %p192 = scmp.ne.s32.totalorder %s181, %s182
      %p193 = scmp.eq.s32.totalorder %s21, 0
      %p194 = por %p192, %p193
      %p195 = scmp.ne.s32.totalorder %s181, %s182
      %p196 = scmp.eq.s32.totalorder %s22, 1
      %p197 = por %p195, %p196
      %p199 = scmp.ne.s32.totalorder %s182, %s198
      %p200 = scmp.eq.s32.totalorder %s22, 0
      %p201 = por %p199, %p200
      %p202 = scmp.le.s32.totalorder 1, %s16
      %p203 = scmp.lt.s32.totalorder %s16, 3
      %p204 = pnand %p202, %p203
      %p205 = pneg %p204
      // Predicated region
      $region9: #{tpu_custom_call.1} parent=5 // pred_check
        _
      $region10: #{tpu_custom_call.1} parent=5 // pred_check_branch
        %207 = sbr.rel (%p204) target = $region12
      $region11: #{tpu_custom_call.1} parent=5 // pred_region
        %s208 = ssub.s32 %s16, 1
        // Predicated region
        $region13: #{tpu_custom_call.1} parent=11 // pred_check
          %p209 = pneg %p63
        $region14: #{tpu_custom_call.1} parent=11 // pred_check_branch
          %211 = sbr.rel (%p209) target = $region16
        $region15: #{tpu_custom_call.1} parent=11 // pred_region
          _
        $region16: #{tpu_custom_call.1} parent=11 // pred_fallthru
          _
        // Predicated region
        $region17: #{tpu_custom_call.1} parent=11 // pred_check
          %p212 = pneg %p84
        $region18: #{tpu_custom_call.1} parent=11 // pred_check_branch
          %214 = sbr.rel (%p212) target = $region20
        $region19: #{tpu_custom_call.1} parent=11 // pred_region
          _
        $region20: #{tpu_custom_call.1} parent=11 // pred_fallthru
          _
        // Predicated region
        $region21: #{tpu_custom_call.1} parent=11 // pred_check
          %p215 = pneg %p105
        $region22: #{tpu_custom_call.1} parent=11 // pred_check_branch
          %217 = sbr.rel (%p215) target = $region24
        $region23: #{tpu_custom_call.1} parent=11 // pred_region
          _
        $region24: #{tpu_custom_call.1} parent=11 // pred_fallthru
          _
        // Predicated region
        $region25: #{tpu_custom_call.1} parent=11 // pred_check
          %p218 = pneg %p126
        $region26: #{tpu_custom_call.1} parent=11 // pred_check_branch
          %220 = sbr.rel (%p218) target = $region28
        $region27: #{tpu_custom_call.1} parent=11 // pred_region
          _
        $region28: #{tpu_custom_call.1} parent=11 // pred_fallthru
          _
        // Predicated region
        $region29: #{tpu_custom_call.1} parent=11 // pred_check
          %p221 = pneg %p147
        $region30: #{tpu_custom_call.1} parent=11 // pred_check_branch
          %223 = sbr.rel (%p221) target = $region32
        $region31: #{tpu_custom_call.1} parent=11 // pred_region
          _
        $region32: #{tpu_custom_call.1} parent=11 // pred_fallthru
          _
        // Predicated region
        $region33: #{tpu_custom_call.1} parent=11 // pred_check
          %p224 = pneg %p168
        $region34: #{tpu_custom_call.1} parent=11 // pred_check_branch
          %226 = sbr.rel (%p224) target = $region36
        $region35: #{tpu_custom_call.1} parent=11 // pred_region
          _
        $region36: #{tpu_custom_call.1} parent=11 // pred_fallthru
          _
      $region12: #{tpu_custom_call.1} parent=5 // pred_fallthru
        _
      %p227 = scmp.lt.s32.totalorder %s16, 2
      // Predicated region
      $region37: #{tpu_custom_call.1} parent=5 // pred_check
        %p228 = pneg %p227
      $region38: #{tpu_custom_call.1} parent=5 // pred_check_branch
        %230 = sbr.rel (%p228) target = $region40
      $region39: #{tpu_custom_call.1} parent=5 // pred_region
        // Predicated region
        $region41: #{tpu_custom_call.1} parent=39 // pred_check
          %p231 = pneg %p36
        $region42: #{tpu_custom_call.1} parent=39 // pred_check_branch
          %233 = sbr.rel (%p231) target = $region44
        $region43: #{tpu_custom_call.1} parent=39 // pred_region
          %s234 = sand.u32 %s26, 1
          %s235 = sand.u32 %s26, 1
          %s236 = smul.addr %s235, 16
          %s237 = scalar_lea.vmem [#allocation2], %s236
          %s238 = smul.u32 2, %s16
          %s239 = smul.addr %s238, 4
          %s240 = scalar_lea.vmem %s0, %s239
          // Predicated region
          $region45: #{tpu_custom_call.1} parent=43 // pred_check
            _
          $region46: #{tpu_custom_call.1} parent=43 // pred_check_branch
            %242 = sbr.rel (0) target = $region48
          $region47: #{tpu_custom_call.1} parent=43 // pred_region
            // Predicated region
            $region49: #{tpu_custom_call.1} parent=47 // pred_check
              _
            $region50: #{tpu_custom_call.1} parent=47 // pred_check_branch
              %244 = sbr.rel (0) target = $region52
            $region51: #{tpu_custom_call.1} parent=47 // pred_region
              // Predicated region
              $region64: #{tpu_custom_call.1} parent=51 // pred_check
                _
              $region65: #{tpu_custom_call.1} parent=51 // pred_check_branch
                %262 = sbr.rel (0) target = $region67
              $region66: #{tpu_custom_call.1} parent=51 // pred_region
                loop: start=0, step=1, limit=1
                $region68: #{tpu_custom_call.1} parent=66 // loop_pre_header
                  _
                $region69: #{tpu_custom_call.1} parent=66 // loop_header
                  %s264 = sphi 0, %s268
                  %p265 = scmp.ge.s32.totalorder %s264, 1
                  %s269 = sphi %s240, %s240
                  %s270 = sphi %s237, %s237
                $region70: #{tpu_custom_call.1} parent=66 // loop_header_branch
                  %267 = sbr.rel (%p265) target = $region74
                $region71: #{tpu_custom_call.1} parent=66 // loop_body
                  %v271 = vld [vmem:[%s269] sm:$0xff]
                  %272 = vst [vmem:[%s270] sm:$0xff] %v271
                  %v273 = vld [vmem:[%s269 + $0x10] sm:$0xff]
                  %274 = vst [vmem:[%s270 + $0x8] sm:$0xff] %v273
                $region72: #{tpu_custom_call.1} parent=66 // loop_footer
                  %s268 = sadd.s32 1, %s264
                $region73: #{tpu_custom_call.1} parent=66 // loop_footer_branch
                  %263 = sbr.rel target = $region69
                $region74: #{tpu_custom_call.1} parent=66 // loop_exit
                  _
              $region67: #{tpu_custom_call.1} parent=51 // pred_fallthru
                _
              // Predicated region
              $region75: #{tpu_custom_call.1} parent=51 // pred_check
                _
              $region76: #{tpu_custom_call.1} parent=51 // pred_check_branch
                %276 = sbr.rel target = $region78
              $region77: #{tpu_custom_call.1} parent=51 // pred_region
                _
              $region78: #{tpu_custom_call.1} parent=51 // pred_fallthru
                _
            $region52: #{tpu_custom_call.1} parent=47 // pred_fallthru
              _
            // Predicated region
            $region53: #{tpu_custom_call.1} parent=47 // pred_check
              _
            $region54: #{tpu_custom_call.1} parent=47 // pred_check_branch
              %246 = sbr.rel target = $region56
            $region55: #{tpu_custom_call.1} parent=47 // pred_region
              %s248 = ssub.s32 256, 1
              loop: start=0, step=1, limit=1
              $region57: #{tpu_custom_call.1} parent=55 // loop_pre_header
                _
              $region58: #{tpu_custom_call.1} parent=55 // loop_header
                %s250 = sphi 0, %s254
                %p251 = scmp.ge.s32.totalorder %s250, 1
                %s255 = sphi %s240, %s240
                %s256 = sphi %s237, %s237
              $region59: #{tpu_custom_call.1} parent=55 // loop_header_branch
                %253 = sbr.rel (%p251) target = $region63
              $region60: #{tpu_custom_call.1} parent=55 // loop_body
                %v257 = vld [vmem:[%s255] sm:%s248]
                %258 = vst [vmem:[%s256] sm:%s248] %v257
                %v259 = vld [vmem:[%s255 + $0x10] sm:%s248]
                %260 = vst [vmem:[%s256 + $0x8] sm:%s248] %v259
              $region61: #{tpu_custom_call.1} parent=55 // loop_footer
                %s254 = sadd.s32 1, %s250
              $region62: #{tpu_custom_call.1} parent=55 // loop_footer_branch
                %249 = sbr.rel target = $region58
              $region63: #{tpu_custom_call.1} parent=55 // loop_exit
                _
            $region56: #{tpu_custom_call.1} parent=47 // pred_fallthru
              _
          $region48: #{tpu_custom_call.1} parent=43 // pred_fallthru
            _
          %277 = vnop
        $region44: #{tpu_custom_call.1} parent=39 // pred_fallthru
          _
      $region40: #{tpu_custom_call.1} parent=5 // pred_fallthru
        _
      %p278 = scmp.le.s32.totalorder 1, %s16
      %p279 = scmp.lt.s32.totalorder %s16, 3
      %p280 = pnand %p278, %p279
      %p281 = pneg %p280
      // Predicated region
      $region79: #{tpu_custom_call.1} parent=5 // pred_check
        _
      $region80: #{tpu_custom_call.1} parent=5 // pred_check_branch
        %283 = sbr.rel (%p280) target = $region82
      $region81: #{tpu_custom_call.1} parent=5 // pred_region
        %s284 = ssub.s32 %s16, 1
        %s285 = sand.u32 %s29, 1
        %s286 = sand.u32 %s29, 1
        %s287 = smul.addr %s286, 16
        %s288 = scalar_lea.vmem [#allocation2], %s287
        // Predicated region
        $region83: #{tpu_custom_call.1} parent=81 // pred_check
          %p289 = pneg %p42
        $region84: #{tpu_custom_call.1} parent=81 // pred_check_branch
          %291 = sbr.rel (%p289) target = $region86
        $region85: #{tpu_custom_call.1} parent=81 // pred_region
          _
        $region86: #{tpu_custom_call.1} parent=81 // pred_fallthru
          _
        %s292 = sand.u32 %s29, 1
        %s293 = sand.u32 %s29, 1
        %s294 = smul.addr %s293, 16
        %s295 = scalar_lea.vmem [#allocation2], %s294
        %p296 = pneg %p42
        %p297 = pneg %p39
        %p298 = pneg %p63
        %p299 = pneg %p60
        %p300 = pneg %p84
        %p301 = pneg %p81
        %p302 = pneg %p105
        %p303 = pneg %p102
        %p304 = pneg %p126
        %p305 = pneg %p123
        %p306 = pneg %p147
        %p307 = pneg %p144
        %p308 = pneg %p168
        %p309 = pneg %p165
        %p310 = pneg %p194
        %p311 = pneg %p191
        %s312 = sand.u32 %s181, 1
        %s313 = scalar_lea.sflag [#allocation4], %s312
        %s314 = sand.u32 %s181, 1
        %s315 = smul.addr %s314, 16
        %s316 = scalar_lea.vmem [#allocation3], %s315
        %s317 = smul.u32 2, %s21
        %s318 = smul.u32 2, %s21
        %v320 = vld [vmem:[%s1] sm:$0xf]
        %v321 = vld [vmem:[%s1 + $0x4] sm:$0xf]
        %v322 = vld [vmem:[%s1 + $0x8] sm:$0xf]
        %v323 = vld [vmem:[%s1 + $0xc] sm:$0xf]
        %v324 = vld [vmem:[%s1 + $0x10] sm:$0xf]
        %v325 = vld [vmem:[%s1 + $0x14] sm:$0xf]
        %v326 = vld [vmem:[%s288] sm:$0xff]
        %v327 = vld [vmem:[%s288 + $0x8] sm:$0xff]
        %v328 = vld [vmem:[%s2] sm:$0xff]
        %v329 = vld [vmem:[%s2 + $0x8] sm:$0xff]
        %v330 = vld [vmem:[%s2 + $0x10] sm:$0xff]
        %v331 = vld [vmem:[%s2 + $0x18] sm:$0xff]
        %v332 = vld [vmem:[%s2 + $0x20] sm:$0xff]
        %v333 = vld [vmem:[%s2 + $0x28] sm:$0xff]
        %335 = vset.pattern.permute.xlu0 0
        %336 = vperm.xlu0 %335, %v328
        %v337 = vpop.permute.xlu0 %336
        %340 = vset.pattern.permute.xlu0 0
        %341 = vperm.xlu0 %340, %v329
        %v342 = vpop.permute.xlu0 %341
        %345 = vset.pattern.permute.xlu0 0
        %346 = vperm.xlu0 %345, %v330
        %v347 = vpop.permute.xlu0 %346
        %350 = vset.pattern.permute.xlu0 0
        %351 = vperm.xlu0 %350, %v331
        %v352 = vpop.permute.xlu0 %351
        %355 = vset.pattern.permute.xlu0 0
        %356 = vperm.xlu0 %355, %v332
        %v357 = vpop.permute.xlu0 %356
        %360 = vset.pattern.permute.xlu0 0
        %361 = vperm.xlu0 %360, %v333
        %v362 = vpop.permute.xlu0 %361
        %v370 = vunpack.c.l.b16 %v320
        %v371 = vunpack.c.l.b16 %v321
        %v372 = vunpack.c.l.b16 %v322
        %v373 = vunpack.c.l.b16 %v323
        %v374 = vunpack.c.l.b16 %v324
        %v375 = vunpack.c.l.b16 %v325
        %v376 = vpack.c.b16 %v371, %v370
        %v377 = vpack.c.b16 %v373, %v372
        %v378 = vpack.c.b16 %v375, %v374
        %v381 = vunpack.c.l.b16 %v326
        %v382 = vunpack.c.h.b16 %v326
        %v383 = vunpack.c.l.b16 %v327
        %v384 = vunpack.c.h.b16 %v327
        %v385 = vpack.c.b16 %v383, %v381
        %v386 = vpack.c.b16 %v384, %v382
        %vm389 = vcmask 130048
        %v391 = vsel %vm389, %v376, 0
        %v394 = vsel %vm389, %v377, 0
        %v397 = vsel %vm389, %v378, 0
        %399 = vmatprep.subr.bf16.mxu0 0
        %400 = vmatpush1.bf16.msra.mxu0 0
        %401 = vmatprep.subr.bf16.mxu0 0
        %402 = vmatpush1.bf16.msra.mxu0 0
        %403 = vmatprep.subr.bf16.mxu0 0
        %404 = vmatpush1.bf16.msra.mxu0 0
        %405 = vmatprep.subr.bf16.mxu0 0
        %406 = vmatpush1.bf16.msra.mxu0 0
        %407 = vmatprep.subr.bf16.mxu0 0
        %408 = vmatpush1.bf16.msra.mxu0 0
        %409 = vmatprep.subr.bf16.mxu0 0
        %410 = vmatpush1.bf16.msra.mxu0 0
        %411 = vmatprep.subr.bf16.mxu0 0
        %412 = vmatpush1.bf16.msra.mxu0 0
        %413 = vmatprep.subr.bf16.mxu0 %v386
        %414 = vmatpush1.bf16.msra.mxu0 %v385
        %415 = vmatprep.subr.bf16.mxu0 0
        %416 = vmatpush2.bf16.msra.mxu0 0
        %417 = vmatprep.subr.bf16.mxu0 0
        %418 = vmatpush2.bf16.msra.mxu0 0
        %419 = vmatprep.subr.bf16.mxu0 0
        %420 = vmatpush2.bf16.msra.mxu0 0
        %421 = vmatprep.subr.bf16.mxu0 0
        %422 = vmatpush2.bf16.msra.mxu0 0
        %423 = vmatprep.subr.bf16.mxu0 0
        %424 = vmatpush2.bf16.msra.mxu0 0
        %425 = vmatprep.subr.bf16.mxu0 0
        %426 = vmatpush2.bf16.msra.mxu0 0
        %427 = vmatprep.subr.bf16.mxu0 0
        %428 = vmatpush2.bf16.msra.mxu0 0
        %429 = vmatprep.subr.bf16.mxu0 0
        %430 = vmatpush2.bf16.msra.mxu0 0
        %431 = vmatprep.mubr.bf16.mxu0 0
        %432 = vmatmul.mubr.bf16.gmra.mxu0 %v391
        %v433 = vpop.f32.mrf.mxu0
        %v434 = vadd.f32 %v337, %v433
        %v435 = vpop.f32.mrf.mxu0
        %v436 = vadd.f32 %v337, %v435
        %v437 = vpop.f32.mrf.mxu0
        %v438 = vadd.f32 %v342, %v437
        %v439 = vpop.f32.mrf.mxu0
        %v440 = vadd.f32 %v342, %v439
        %441 = vmatprep.mubr.bf16.mxu0 0
        %442 = vmatmul.mubr.bf16.gmra.mxu0 %v394
        %v443 = vpop.f32.mrf.mxu0
        %v444 = vadd.f32 %v347, %v443
        %v445 = vpop.f32.mrf.mxu0
        %v446 = vadd.f32 %v347, %v445
        %v447 = vpop.f32.mrf.mxu0
        %v448 = vadd.f32 %v352, %v447
        %v449 = vpop.f32.mrf.mxu0
        %v450 = vadd.f32 %v352, %v449
        %451 = vmatprep.mubr.bf16.mxu0 0
        %452 = vmatmul.mubr.bf16.gmra.mxu0 %v397
        %v453 = vpop.f32.mrf.mxu0
        %v454 = vadd.f32 %v357, %v453
        %v455 = vpop.f32.mrf.mxu0
        %v456 = vadd.f32 %v357, %v455
        %v457 = vpop.f32.mrf.mxu0
        %v458 = vadd.f32 %v362, %v457
        %v459 = vpop.f32.mrf.mxu0
        %v460 = vadd.f32 %v362, %v459
        %461 = vdwg.mxu0
        %v462 = vld [vmem:[%s3] sm:$0xf]
        %v463 = vld [vmem:[%s3 + $0x4] sm:$0xf]
        %v464 = vld [vmem:[%s3 + $0x8] sm:$0xf]
        %v465 = vld [vmem:[%s3 + $0xc] sm:$0xf]
        %v466 = vld [vmem:[%s3 + $0x10] sm:$0xf]
        %v467 = vld [vmem:[%s3 + $0x14] sm:$0xf]
        %v468 = vpack.c.bf16 %v438, %v434
        %v469 = vpack.c.bf16 %v440, %v436
        %v470 = vpack.c.bf16 %v448, %v444
        %v471 = vpack.c.bf16 %v450, %v446
        %v472 = vpack.c.bf16 %v458, %v454
        %v473 = vpack.c.bf16 %v460, %v456
        %v474 = vld [vmem:[%s4] sm:$0xff]
        %v475 = vld [vmem:[%s4 + $0x8] sm:$0xff]
        %v476 = vld [vmem:[%s4 + $0x10] sm:$0xff]
        %v477 = vld [vmem:[%s4 + $0x18] sm:$0xff]
        %v478 = vld [vmem:[%s4 + $0x20] sm:$0xff]
        %v479 = vld [vmem:[%s4 + $0x28] sm:$0xff]
        %481 = vset.pattern.permute.xlu0 0
        %482 = vperm.xlu0 %481, %v474
        %v483 = vpop.permute.xlu0 %482
        %486 = vset.pattern.permute.xlu0 0
        %487 = vperm.xlu0 %486, %v475
        %v488 = vpop.permute.xlu0 %487
        %491 = vset.pattern.permute.xlu0 0
        %492 = vperm.xlu0 %491, %v476
        %v493 = vpop.permute.xlu0 %492
        %496 = vset.pattern.permute.xlu0 0
        %497 = vperm.xlu0 %496, %v477
        %v498 = vpop.permute.xlu0 %497
        %501 = vset.pattern.permute.xlu0 0
        %502 = vperm.xlu0 %501, %v478
        %v503 = vpop.permute.xlu0 %502
        %506 = vset.pattern.permute.xlu0 0
        %507 = vperm.xlu0 %506, %v479
        %v508 = vpop.permute.xlu0 %507
        %v516 = vunpack.c.l.b16 %v462
        %v517 = vunpack.c.l.b16 %v463
        %v518 = vunpack.c.l.b16 %v464
        %v519 = vunpack.c.l.b16 %v465
        %v520 = vunpack.c.l.b16 %v466
        %v521 = vunpack.c.l.b16 %v467
        %v522 = vpack.c.b16 %v517, %v516
        %v523 = vpack.c.b16 %v519, %v518
        %v524 = vpack.c.b16 %v521, %v520
        %vm525 = vcmask 392192
        %v527 = vsel %vm525, %v522, 0
        %v530 = vsel %vm525, %v523, 0
        %v533 = vsel %vm525, %v524, 0
        %535 = vmatprep.subr.bf16.mxu0 0
        %536 = vmatpush1.bf16.msra.mxu0 0
        %537 = vmatprep.subr.bf16.mxu0 0
        %538 = vmatpush1.bf16.msra.mxu0 0
        %539 = vmatprep.subr.bf16.mxu0 0
        %540 = vmatpush1.bf16.msra.mxu0 0
        %541 = vmatprep.subr.bf16.mxu0 0
        %542 = vmatpush1.bf16.msra.mxu0 0
        %543 = vmatprep.subr.bf16.mxu0 0
        %544 = vmatpush1.bf16.msra.mxu0 0
        %545 = vmatprep.subr.bf16.mxu0 %v473
        %546 = vmatpush1.bf16.msra.mxu0 %v472
        %547 = vmatprep.subr.bf16.mxu0 %v471
        %548 = vmatpush1.bf16.msra.mxu0 %v470
        %549 = vmatprep.subr.bf16.mxu0 %v469
        %550 = vmatpush1.bf16.msra.mxu0 %v468
        %551 = vmatprep.subr.bf16.mxu0 0
        %552 = vmatpush2.bf16.msra.mxu0 0
        %553 = vmatprep.subr.bf16.mxu0 0
        %554 = vmatpush2.bf16.msra.mxu0 0
        %555 = vmatprep.subr.bf16.mxu0 0
        %556 = vmatpush2.bf16.msra.mxu0 0
        %557 = vmatprep.subr.bf16.mxu0 0
        %558 = vmatpush2.bf16.msra.mxu0 0
        %559 = vmatprep.subr.bf16.mxu0 0
        %560 = vmatpush2.bf16.msra.mxu0 0
        %561 = vmatprep.subr.bf16.mxu0 0
        %562 = vmatpush2.bf16.msra.mxu0 0
        %563 = vmatprep.subr.bf16.mxu0 0
        %564 = vmatpush2.bf16.msra.mxu0 0
        %565 = vmatprep.subr.bf16.mxu0 0
        %566 = vmatpush2.bf16.msra.mxu0 0
        %567 = vmatprep.mubr.bf16.mxu0 0
        %568 = vmatmul.mubr.bf16.gmra.mxu0 %v527
        %v569 = vpop.f32.mrf.mxu0
        %v570 = vadd.f32 %v483, %v569
        %v571 = vpop.f32.mrf.mxu0
        %v572 = vadd.f32 %v483, %v571
        %v573 = vpop.f32.mrf.mxu0
        %v574 = vadd.f32 %v488, %v573
        %v575 = vpop.f32.mrf.mxu0
        %v576 = vadd.f32 %v488, %v575
        %577 = vmatprep.mubr.bf16.mxu0 0
        %578 = vmatmul.mubr.bf16.gmra.mxu0 %v530
        %v579 = vpop.f32.mrf.mxu0
        %v580 = vadd.f32 %v493, %v579
        %v581 = vpop.f32.mrf.mxu0
        %v582 = vadd.f32 %v493, %v581
        %v583 = vpop.f32.mrf.mxu0
        %v584 = vadd.f32 %v498, %v583
        %v585 = vpop.f32.mrf.mxu0
        %v586 = vadd.f32 %v498, %v585
        %587 = vmatprep.mubr.bf16.mxu0 0
        %588 = vmatmul.mubr.bf16.gmra.mxu0 %v533
        %v589 = vpop.f32.mrf.mxu0
        %v590 = vadd.f32 %v503, %v589
        %v591 = vpop.f32.mrf.mxu0
        %v592 = vadd.f32 %v503, %v591
        %v593 = vpop.f32.mrf.mxu0
        %v594 = vadd.f32 %v508, %v593
        %v595 = vpop.f32.mrf.mxu0
        %v596 = vadd.f32 %v508, %v595
        %597 = vdwg.mxu0
        %v598 = vmin.f32 %v570, 20.0
        %v599 = vmin.f32 %v572, 20.0
        %v600 = vmin.f32 %v574, 20.0
        %v601 = vmin.f32 %v576, 20.0
        %v602 = vmin.f32 %v580, 20.0
        %v603 = vmin.f32 %v582, 20.0
        %v604 = vmin.f32 %v584, 20.0
        %v605 = vmin.f32 %v586, 20.0
        %v606 = vmin.f32 %v590, 20.0
        %v607 = vmin.f32 %v592, 20.0
        %v608 = vmin.f32 %v594, 20.0
        %v609 = vmin.f32 %v596, 20.0
        %v610 = vmul.f32 %v598, 1.442695
        %v611 = vpow.pop %v610
        %v612 = vmul.f32 %v599, 1.442695
        %v613 = vpow.pop %v612
        %v614 = vmul.f32 %v600, 1.442695
        %v615 = vpow.pop %v614
        %v616 = vmul.f32 %v601, 1.442695
        %v617 = vpow.pop %v616
        %v618 = vmul.f32 %v602, 1.442695
        %v619 = vpow.pop %v618
        %v620 = vmul.f32 %v603, 1.442695
        %v621 = vpow.pop %v620
        %v622 = vmul.f32 %v604, 1.442695
        %v623 = vpow.pop %v622
        %v624 = vmul.f32 %v605, 1.442695
        %v625 = vpow.pop %v624
        %v626 = vmul.f32 %v606, 1.442695
        %v627 = vpow.pop %v626
        %v628 = vmul.f32 %v607, 1.442695
        %v629 = vpow.pop %v628
        %v630 = vmul.f32 %v608, 1.442695
        %v631 = vpow.pop %v630
        %v632 = vmul.f32 %v609, 1.442695
        %v633 = vpow.pop %v632
        %v634 = vadd.f32 %v611, 1.0
        %v635 = vadd.f32 %v613, 1.0
        %v636 = vadd.f32 %v615, 1.0
        %v637 = vadd.f32 %v617, 1.0
        %v638 = vadd.f32 %v619, 1.0
        %v639 = vadd.f32 %v621, 1.0
        %v640 = vadd.f32 %v623, 1.0
        %v641 = vadd.f32 %v625, 1.0
        %v642 = vadd.f32 %v627, 1.0
        %v643 = vadd.f32 %v629, 1.0
        %v644 = vadd.f32 %v631, 1.0
        %v645 = vadd.f32 %v633, 1.0
        %v646 = vmul.f32 %v634, %v634
        %v647 = vmul.f32 %v635, %v635
        %v648 = vmul.f32 %v636, %v636
        %v649 = vmul.f32 %v637, %v637
        %v650 = vmul.f32 %v638, %v638
        %v651 = vmul.f32 %v639, %v639
        %v652 = vmul.f32 %v640, %v640
        %v653 = vmul.f32 %v641, %v641
        %v654 = vmul.f32 %v642, %v642
        %v655 = vmul.f32 %v643, %v643
        %v656 = vmul.f32 %v644, %v644
        %v657 = vmul.f32 %v645, %v645
        %v658 = vadd.f32 %v646, 1.0
        %v659 = vadd.f32 %v647, 1.0
        %v660 = vadd.f32 %v648, 1.0
        %v661 = vadd.f32 %v649, 1.0
        %v662 = vadd.f32 %v650, 1.0
        %v663 = vadd.f32 %v651, 1.0
        %v664 = vadd.f32 %v652, 1.0
        %v665 = vadd.f32 %v653, 1.0
        %v666 = vadd.f32 %v654, 1.0
        %v667 = vadd.f32 %v655, 1.0
        %v668 = vadd.f32 %v656, 1.0
        %v669 = vadd.f32 %v657, 1.0
        %v670 = vrcp.pop %v658
        %v671 = vrcp.pop %v659
        %v672 = vrcp.pop %v660
        %v673 = vrcp.pop %v661
        %v674 = vrcp.pop %v662
        %v675 = vrcp.pop %v663
        %v676 = vrcp.pop %v664
        %v677 = vrcp.pop %v665
        %v678 = vrcp.pop %v666
        %v679 = vrcp.pop %v667
        %v680 = vrcp.pop %v668
        %v681 = vrcp.pop %v669
        %v682 = vmul.f32 %v670, 2.0
        %v683 = vmul.f32 %v671, 2.0
        %v684 = vmul.f32 %v672, 2.0
        %v685 = vmul.f32 %v673, 2.0
        %v686 = vmul.f32 %v674, 2.0
        %v687 = vmul.f32 %v675, 2.0
        %v688 = vmul.f32 %v676, 2.0
        %v689 = vmul.f32 %v677, 2.0
        %v690 = vmul.f32 %v678, 2.0
        %v691 = vmul.f32 %v679, 2.0
        %v692 = vmul.f32 %v680, 2.0
        %v693 = vmul.f32 %v681, 2.0
        %v694 = vsub.f32 1.0, %v682
        %v695 = vsub.f32 1.0, %v683
        %v696 = vsub.f32 1.0, %v684
        %v697 = vsub.f32 1.0, %v685
        %v698 = vsub.f32 1.0, %v686
        %v699 = vsub.f32 1.0, %v687
        %v700 = vsub.f32 1.0, %v688
        %v701 = vsub.f32 1.0, %v689
        %v702 = vsub.f32 1.0, %v690
        %v703 = vsub.f32 1.0, %v691
        %v704 = vsub.f32 1.0, %v692
        %v705 = vsub.f32 1.0, %v693
        %v706 = vmul.f32 %v570, %v694
        %v707 = vmul.f32 %v572, %v695
        %v708 = vmul.f32 %v574, %v696
        %v709 = vmul.f32 %v576, %v697
        %v710 = vmul.f32 %v580, %v698
        %v711 = vmul.f32 %v582, %v699
        %v712 = vmul.f32 %v584, %v700
        %v713 = vmul.f32 %v586, %v701
        %v714 = vmul.f32 %v590, %v702
        %v715 = vmul.f32 %v592, %v703
        %v716 = vmul.f32 %v594, %v704
        %v717 = vmul.f32 %v596, %v705
        %v718 = vadd.f32 %v706, %v434
        %v719 = vadd.f32 %v707, %v436
        %v720 = vadd.f32 %v708, %v438
        %v721 = vadd.f32 %v709, %v440
        %v722 = vadd.f32 %v710, %v444
        %v723 = vadd.f32 %v711, %v446
        %v724 = vadd.f32 %v712, %v448
        %v725 = vadd.f32 %v713, %v450
        %v726 = vadd.f32 %v714, %v454
        %v727 = vadd.f32 %v715, %v456
        %v728 = vadd.f32 %v716, %v458
        %v729 = vadd.f32 %v717, %v460
        %s730 = scalar_lea.vmem %s3, 24
        %v731 = vld [vmem:[%s730] sm:$0xf]
        %v732 = vld [vmem:[%s730 + $0x4] sm:$0xf]
        %v733 = vld [vmem:[%s730 + $0x8] sm:$0xf]
        %v734 = vld [vmem:[%s730 + $0xc] sm:$0xf]
        %v735 = vld [vmem:[%s730 + $0x10] sm:$0xf]
        %v736 = vld [vmem:[%s730 + $0x14] sm:$0xf]
        %v737 = vpack.c.bf16 %v720, %v718
        %v738 = vpack.c.bf16 %v721, %v719
        %v739 = vpack.c.bf16 %v724, %v722
        %v740 = vpack.c.bf16 %v725, %v723
        %v741 = vpack.c.bf16 %v728, %v726
        %v742 = vpack.c.bf16 %v729, %v727
        %s743 = scalar_lea.vmem %s4, 48
        %v744 = vld [vmem:[%s743] sm:$0xff]
        %v745 = vld [vmem:[%s743 + $0x8] sm:$0xff]
        %v746 = vld [vmem:[%s743 + $0x10] sm:$0xff]
        %v747 = vld [vmem:[%s743 + $0x18] sm:$0xff]
        %v748 = vld [vmem:[%s743 + $0x20] sm:$0xff]
        %v749 = vld [vmem:[%s743 + $0x28] sm:$0xff]
        %751 = vset.pattern.permute.xlu0 0
        %752 = vperm.xlu0 %751, %v744
        %v753 = vpop.permute.xlu0 %752
        %756 = vset.pattern.permute.xlu0 0
        %757 = vperm.xlu0 %756, %v745
        %v758 = vpop.permute.xlu0 %757
        %761 = vset.pattern.permute.xlu0 0
        %762 = vperm.xlu0 %761, %v746
        %v763 = vpop.permute.xlu0 %762
        %766 = vset.pattern.permute.xlu0 0
        %767 = vperm.xlu0 %766, %v747
        %v768 = vpop.permute.xlu0 %767
        %771 = vset.pattern.permute.xlu0 0
        %772 = vperm.xlu0 %771, %v748
        %v773 = vpop.permute.xlu0 %772
        %776 = vset.pattern.permute.xlu0 0
        %777 = vperm.xlu0 %776, %v749
        %v778 = vpop.permute.xlu0 %777
        %v786 = vunpack.c.l.b16 %v731
        %v787 = vunpack.c.l.b16 %v732
        %v788 = vunpack.c.l.b16 %v733
        %v789 = vunpack.c.l.b16 %v734
        %v790 = vunpack.c.l.b16 %v735
        %v791 = vunpack.c.l.b16 %v736
        %v792 = vpack.c.b16 %v787, %v786
        %v793 = vpack.c.b16 %v789, %v788
        %v794 = vpack.c.b16 %v791, %v790
        %v796 = vsel %vm525, %v792, 0
        %v799 = vsel %vm525, %v793, 0
        %v802 = vsel %vm525, %v794, 0
        %804 = vmatprep.subr.bf16.mxu0 0
        %805 = vmatpush1.bf16.msra.mxu0 0
        %806 = vmatprep.subr.bf16.mxu0 0
        %807 = vmatpush1.bf16.msra.mxu0 0
        %808 = vmatprep.subr.bf16.mxu0 0
        %809 = vmatpush1.bf16.msra.mxu0 0
        %810 = vmatprep.subr.bf16.mxu0 0
        %811 = vmatpush1.bf16.msra.mxu0 0
        %812 = vmatprep.subr.bf16.mxu0 0
        %813 = vmatpush1.bf16.msra.mxu0 0
        %814 = vmatprep.subr.bf16.mxu0 %v742
        %815 = vmatpush1.bf16.msra.mxu0 %v741
        %816 = vmatprep.subr.bf16.mxu0 %v740
        %817 = vmatpush1.bf16.msra.mxu0 %v739
        %818 = vmatprep.subr.bf16.mxu0 %v738
        %819 = vmatpush1.bf16.msra.mxu0 %v737
        %820 = vmatprep.subr.bf16.mxu0 0
        %821 = vmatpush2.bf16.msra.mxu0 0
        %822 = vmatprep.subr.bf16.mxu0 0
        %823 = vmatpush2.bf16.msra.mxu0 0
        %824 = vmatprep.subr.bf16.mxu0 0
        %825 = vmatpush2.bf16.msra.mxu0 0
        %826 = vmatprep.subr.bf16.mxu0 0
        %827 = vmatpush2.bf16.msra.mxu0 0
        %828 = vmatprep.subr.bf16.mxu0 0
        %829 = vmatpush2.bf16.msra.mxu0 0
        %830 = vmatprep.subr.bf16.mxu0 0
        %831 = vmatpush2.bf16.msra.mxu0 0
        %832 = vmatprep.subr.bf16.mxu0 0
        %833 = vmatpush2.bf16.msra.mxu0 0
        %834 = vmatprep.subr.bf16.mxu0 0
        %835 = vmatpush2.bf16.msra.mxu0 0
        %836 = vmatprep.mubr.bf16.mxu0 0
        %837 = vmatmul.mubr.bf16.gmra.mxu0 %v796
        %v838 = vpop.f32.mrf.mxu0
        %v839 = vadd.f32 %v753, %v838
        %v840 = vpop.f32.mrf.mxu0
        %v841 = vadd.f32 %v753, %v840
        %v842 = vpop.f32.mrf.mxu0
        %v843 = vadd.f32 %v758, %v842
        %v844 = vpop.f32.mrf.mxu0
        %v845 = vadd.f32 %v758, %v844
        %846 = vmatprep.mubr.bf16.mxu0 0
        %847 = vmatmul.mubr.bf16.gmra.mxu0 %v799
        %v848 = vpop.f32.mrf.mxu0
        %v849 = vadd.f32 %v763, %v848
        %v850 = vpop.f32.mrf.mxu0
        %v851 = vadd.f32 %v763, %v850
        %v852 = vpop.f32.mrf.mxu0
        %v853 = vadd.f32 %v768, %v852
        %v854 = vpop.f32.mrf.mxu0
        %v855 = vadd.f32 %v768, %v854
        %856 = vmatprep.mubr.bf16.mxu0 0
        %857 = vmatmul.mubr.bf16.gmra.mxu0 %v802
        %v858 = vpop.f32.mrf.mxu0
        %v859 = vadd.f32 %v773, %v858
        %v860 = vpop.f32.mrf.mxu0
        %v861 = vadd.f32 %v773, %v860
        %v862 = vpop.f32.mrf.mxu0
        %v863 = vadd.f32 %v778, %v862
        %v864 = vpop.f32.mrf.mxu0
        %v865 = vadd.f32 %v778, %v864
        %866 = vdwg.mxu0
        %v867 = vmin.f32 %v839, 20.0
        %v868 = vmin.f32 %v841, 20.0
        %v869 = vmin.f32 %v843, 20.0
        %v870 = vmin.f32 %v845, 20.0
        %v871 = vmin.f32 %v849, 20.0
        %v872 = vmin.f32 %v851, 20.0
        %v873 = vmin.f32 %v853, 20.0
        %v874 = vmin.f32 %v855, 20.0
        %v875 = vmin.f32 %v859, 20.0
        %v876 = vmin.f32 %v861, 20.0
        %v877 = vmin.f32 %v863, 20.0
        %v878 = vmin.f32 %v865, 20.0
        %v879 = vmul.f32 %v867, 1.442695
        %v880 = vpow.pop %v879
        %v881 = vmul.f32 %v868, 1.442695
        %v882 = vpow.pop %v881
        %v883 = vmul.f32 %v869, 1.442695
        %v884 = vpow.pop %v883
        %v885 = vmul.f32 %v870, 1.442695
        %v886 = vpow.pop %v885
        %v887 = vmul.f32 %v871, 1.442695
        %v888 = vpow.pop %v887
        %v889 = vmul.f32 %v872, 1.442695
        %v890 = vpow.pop %v889
        %v891 = vmul.f32 %v873, 1.442695
        %v892 = vpow.pop %v891
        %v893 = vmul.f32 %v874, 1.442695
        %v894 = vpow.pop %v893
        %v895 = vmul.f32 %v875, 1.442695
        %v896 = vpow.pop %v895
        %v897 = vmul.f32 %v876, 1.442695
        %v898 = vpow.pop %v897
        %v899 = vmul.f32 %v877, 1.442695
        %v900 = vpow.pop %v899
        %v901 = vmul.f32 %v878, 1.442695
        %v902 = vpow.pop %v901
        %v903 = vadd.f32 %v880, 1.0
        %v904 = vadd.f32 %v882, 1.0
        %v905 = vadd.f32 %v884, 1.0
        %v906 = vadd.f32 %v886, 1.0
        %v907 = vadd.f32 %v888, 1.0
        %v908 = vadd.f32 %v890, 1.0
        %v909 = vadd.f32 %v892, 1.0
        %v910 = vadd.f32 %v894, 1.0
        %v911 = vadd.f32 %v896, 1.0
        %v912 = vadd.f32 %v898, 1.0
        %v913 = vadd.f32 %v900, 1.0
        %v914 = vadd.f32 %v902, 1.0
        %v915 = vmul.f32 %v903, %v903
        %v916 = vmul.f32 %v904, %v904
        %v917 = vmul.f32 %v905, %v905
        %v918 = vmul.f32 %v906, %v906
        %v919 = vmul.f32 %v907, %v907
        %v920 = vmul.f32 %v908, %v908
        %v921 = vmul.f32 %v909, %v909
        %v922 = vmul.f32 %v910, %v910
        %v923 = vmul.f32 %v911, %v911
        %v924 = vmul.f32 %v912, %v912
        %v925 = vmul.f32 %v913, %v913
        %v926 = vmul.f32 %v914, %v914
        %v927 = vadd.f32 %v915, 1.0
        %v928 = vadd.f32 %v916, 1.0
        %v929 = vadd.f32 %v917, 1.0
        %v930 = vadd.f32 %v918, 1.0
        %v931 = vadd.f32 %v919, 1.0
        %v932 = vadd.f32 %v920, 1.0
        %v933 = vadd.f32 %v921, 1.0
        %v934 = vadd.f32 %v922, 1.0
        %v935 = vadd.f32 %v923, 1.0
        %v936 = vadd.f32 %v924, 1.0
        %v937 = vadd.f32 %v925, 1.0
        %v938 = vadd.f32 %v926, 1.0
        %v939 = vrcp.pop %v927
        %v940 = vrcp.pop %v928
        %v941 = vrcp.pop %v929
        %v942 = vrcp.pop %v930
        %v943 = vrcp.pop %v931
        %v944 = vrcp.pop %v932
        %v945 = vrcp.pop %v933
        %v946 = vrcp.pop %v934
        %v947 = vrcp.pop %v935
        %v948 = vrcp.pop %v936
        %v949 = vrcp.pop %v937
        %v950 = vrcp.pop %v938
        %v951 = vmul.f32 %v939, 2.0
        %v952 = vmul.f32 %v940, 2.0
        %v953 = vmul.f32 %v941, 2.0
        %v954 = vmul.f32 %v942, 2.0
        %v955 = vmul.f32 %v943, 2.0
        %v956 = vmul.f32 %v944, 2.0
        %v957 = vmul.f32 %v945, 2.0
        %v958 = vmul.f32 %v946, 2.0
        %v959 = vmul.f32 %v947, 2.0
        %v960 = vmul.f32 %v948, 2.0
        %v961 = vmul.f32 %v949, 2.0
        %v962 = vmul.f32 %v950, 2.0
        %v963 = vsub.f32 1.0, %v951
        %v964 = vsub.f32 1.0, %v952
        %v965 = vsub.f32 1.0, %v953
        %v966 = vsub.f32 1.0, %v954
        %v967 = vsub.f32 1.0, %v955
        %v968 = vsub.f32 1.0, %v956
        %v969 = vsub.f32 1.0, %v957
        %v970 = vsub.f32 1.0, %v958
        %v971 = vsub.f32 1.0, %v959
        %v972 = vsub.f32 1.0, %v960
        %v973 = vsub.f32 1.0, %v961
        %v974 = vsub.f32 1.0, %v962
        %v975 = vmul.f32 %v839, %v963
        %v976 = vmul.f32 %v841, %v964
        %v977 = vmul.f32 %v843, %v965
        %v978 = vmul.f32 %v845, %v966
        %v979 = vmul.f32 %v849, %v967
        %v980 = vmul.f32 %v851, %v968
        %v981 = vmul.f32 %v853, %v969
        %v982 = vmul.f32 %v855, %v970
        %v983 = vmul.f32 %v859, %v971
        %v984 = vmul.f32 %v861, %v972
        %v985 = vmul.f32 %v863, %v973
        %v986 = vmul.f32 %v865, %v974
        %v987 = vadd.f32 %v975, %v718
        %v988 = vadd.f32 %v976, %v719
        %v989 = vadd.f32 %v977, %v720
        %v990 = vadd.f32 %v978, %v721
        %v991 = vadd.f32 %v979, %v722
        %v992 = vadd.f32 %v980, %v723
        %v993 = vadd.f32 %v981, %v724
        %v994 = vadd.f32 %v982, %v725
        %v995 = vadd.f32 %v983, %v726
        %v996 = vadd.f32 %v984, %v727
        %v997 = vadd.f32 %v985, %v728
        %v998 = vadd.f32 %v986, %v729
        %s999 = scalar_lea.vmem %s3, 48
        %v1000 = vld [vmem:[%s999] sm:$0xf]
        %v1001 = vld [vmem:[%s999 + $0x4] sm:$0xf]
        %v1002 = vld [vmem:[%s999 + $0x8] sm:$0xf]
        %v1003 = vld [vmem:[%s999 + $0xc] sm:$0xf]
        %v1004 = vld [vmem:[%s999 + $0x10] sm:$0xf]
        %v1005 = vld [vmem:[%s999 + $0x14] sm:$0xf]
        %v1006 = vpack.c.bf16 %v989, %v987
        %v1007 = vpack.c.bf16 %v990, %v988
        %v1008 = vpack.c.bf16 %v993, %v991
        %v1009 = vpack.c.bf16 %v994, %v992
        %v1010 = vpack.c.bf16 %v997, %v995
        %v1011 = vpack.c.bf16 %v998, %v996
        %s1012 = scalar_lea.vmem %s4, 96
        %v1013 = vld [vmem:[%s1012] sm:$0xff]
        %v1014 = vld [vmem:[%s1012 + $0x8] sm:$0xff]
        %v1015 = vld [vmem:[%s1012 + $0x10] sm:$0xff]
        %v1016 = vld [vmem:[%s1012 + $0x18] sm:$0xff]
        %v1017 = vld [vmem:[%s1012 + $0x20] sm:$0xff]
        %v1018 = vld [vmem:[%s1012 + $0x28] sm:$0xff]
        %1020 = vset.pattern.permute.xlu0 0
        %1021 = vperm.xlu0 %1020, %v1013
        %v1022 = vpop.permute.xlu0 %1021
        %1025 = vset.pattern.permute.xlu0 0
        %1026 = vperm.xlu0 %1025, %v1014
        %v1027 = vpop.permute.xlu0 %1026
        %1030 = vset.pattern.permute.xlu0 0
        %1031 = vperm.xlu0 %1030, %v1015
        %v1032 = vpop.permute.xlu0 %1031
        %1035 = vset.pattern.permute.xlu0 0
        %1036 = vperm.xlu0 %1035, %v1016
        %v1037 = vpop.permute.xlu0 %1036
        %1040 = vset.pattern.permute.xlu0 0
        %1041 = vperm.xlu0 %1040, %v1017
        %v1042 = vpop.permute.xlu0 %1041
        %1045 = vset.pattern.permute.xlu0 0
        %1046 = vperm.xlu0 %1045, %v1018
        %v1047 = vpop.permute.xlu0 %1046
        %v1055 = vunpack.c.l.b16 %v1000
        %v1056 = vunpack.c.l.b16 %v1001
        %v1057 = vunpack.c.l.b16 %v1002
        %v1058 = vunpack.c.l.b16 %v1003
        %v1059 = vunpack.c.l.b16 %v1004
        %v1060 = vunpack.c.l.b16 %v1005
        %v1061 = vpack.c.b16 %v1056, %v1055
        %v1062 = vpack.c.b16 %v1058, %v1057
        %v1063 = vpack.c.b16 %v1060, %v1059
        %v1065 = vsel %vm525, %v1061, 0
        %v1068 = vsel %vm525, %v1062, 0
        %v1071 = vsel %vm525, %v1063, 0
        %1073 = vmatprep.subr.bf16.mxu0 0
        %1074 = vmatpush1.bf16.msra.mxu0 0
        %1075 = vmatprep.subr.bf16.mxu0 0
        %1076 = vmatpush1.bf16.msra.mxu0 0
        %1077 = vmatprep.subr.bf16.mxu0 0
        %1078 = vmatpush1.bf16.msra.mxu0 0
        %1079 = vmatprep.subr.bf16.mxu0 0
        %1080 = vmatpush1.bf16.msra.mxu0 0
        %1081 = vmatprep.subr.bf16.mxu0 0
        %1082 = vmatpush1.bf16.msra.mxu0 0
        %1083 = vmatprep.subr.bf16.mxu0 %v1011
        %1084 = vmatpush1.bf16.msra.mxu0 %v1010
        %1085 = vmatprep.subr.bf16.mxu0 %v1009
        %1086 = vmatpush1.bf16.msra.mxu0 %v1008
        %1087 = vmatprep.subr.bf16.mxu0 %v1007
        %1088 = vmatpush1.bf16.msra.mxu0 %v1006
        %1089 = vmatprep.subr.bf16.mxu0 0
        %1090 = vmatpush2.bf16.msra.mxu0 0
        %1091 = vmatprep.subr.bf16.mxu0 0
        %1092 = vmatpush2.bf16.msra.mxu0 0
        %1093 = vmatprep.subr.bf16.mxu0 0
        %1094 = vmatpush2.bf16.msra.mxu0 0
        %1095 = vmatprep.subr.bf16.mxu0 0
        %1096 = vmatpush2.bf16.msra.mxu0 0
        %1097 = vmatprep.subr.bf16.mxu0 0
        %1098 = vmatpush2.bf16.msra.mxu0 0
        %1099 = vmatprep.subr.bf16.mxu0 0
        %1100 = vmatpush2.bf16.msra.mxu0 0
        %1101 = vmatprep.subr.bf16.mxu0 0
        %1102 = vmatpush2.bf16.msra.mxu0 0
        %1103 = vmatprep.subr.bf16.mxu0 0
        %1104 = vmatpush2.bf16.msra.mxu0 0
        %1105 = vmatprep.mubr.bf16.mxu0 0
        %1106 = vmatmul.mubr.bf16.gmra.mxu0 %v1065
        %v1107 = vpop.f32.mrf.mxu0
        %v1108 = vadd.f32 %v1022, %v1107
        %v1109 = vpop.f32.mrf.mxu0
        %v1110 = vadd.f32 %v1022, %v1109
        %v1111 = vpop.f32.mrf.mxu0
        %v1112 = vadd.f32 %v1027, %v1111
        %v1113 = vpop.f32.mrf.mxu0
        %v1114 = vadd.f32 %v1027, %v1113
        %1115 = vmatprep.mubr.bf16.mxu0 0
        %1116 = vmatmul.mubr.bf16.gmra.mxu0 %v1068
        %v1117 = vpop.f32.mrf.mxu0
        %v1118 = vadd.f32 %v1032, %v1117
        %v1119 = vpop.f32.mrf.mxu0
        %v1120 = vadd.f32 %v1032, %v1119
        %v1121 = vpop.f32.mrf.mxu0
        %v1122 = vadd.f32 %v1037, %v1121
        %v1123 = vpop.f32.mrf.mxu0
        %v1124 = vadd.f32 %v1037, %v1123
        %1125 = vmatprep.mubr.bf16.mxu0 0
        %1126 = vmatmul.mubr.bf16.gmra.mxu0 %v1071
        %v1127 = vpop.f32.mrf.mxu0
        %v1128 = vadd.f32 %v1042, %v1127
        %v1129 = vpop.f32.mrf.mxu0
        %v1130 = vadd.f32 %v1042, %v1129
        %v1131 = vpop.f32.mrf.mxu0
        %v1132 = vadd.f32 %v1047, %v1131
        %v1133 = vpop.f32.mrf.mxu0
        %v1134 = vadd.f32 %v1047, %v1133
        %1135 = vdwg.mxu0
        %v1136 = vmin.f32 %v1108, 20.0
        %v1137 = vmin.f32 %v1110, 20.0
        %v1138 = vmin.f32 %v1112, 20.0
        %v1139 = vmin.f32 %v1114, 20.0
        %v1140 = vmin.f32 %v1118, 20.0
        %v1141 = vmin.f32 %v1120, 20.0
        %v1142 = vmin.f32 %v1122, 20.0
        %v1143 = vmin.f32 %v1124, 20.0
        %v1144 = vmin.f32 %v1128, 20.0
        %v1145 = vmin.f32 %v1130, 20.0
        %v1146 = vmin.f32 %v1132, 20.0
        %v1147 = vmin.f32 %v1134, 20.0
        %v1148 = vmul.f32 %v1136, 1.442695
        %v1149 = vpow.pop %v1148
        %v1150 = vmul.f32 %v1137, 1.442695
        %v1151 = vpow.pop %v1150
        %v1152 = vmul.f32 %v1138, 1.442695
        %v1153 = vpow.pop %v1152
        %v1154 = vmul.f32 %v1139, 1.442695
        %v1155 = vpow.pop %v1154
        %v1156 = vmul.f32 %v1140, 1.442695
        %v1157 = vpow.pop %v1156
        %v1158 = vmul.f32 %v1141, 1.442695
        %v1159 = vpow.pop %v1158
        %v1160 = vmul.f32 %v1142, 1.442695
        %v1161 = vpow.pop %v1160
        %v1162 = vmul.f32 %v1143, 1.442695
        %v1163 = vpow.pop %v1162
        %v1164 = vmul.f32 %v1144, 1.442695
        %v1165 = vpow.pop %v1164
        %v1166 = vmul.f32 %v1145, 1.442695
        %v1167 = vpow.pop %v1166
        %v1168 = vmul.f32 %v1146, 1.442695
        %v1169 = vpow.pop %v1168
        %v1170 = vmul.f32 %v1147, 1.442695
        %v1171 = vpow.pop %v1170
        %v1172 = vadd.f32 %v1149, 1.0
        %v1173 = vadd.f32 %v1151, 1.0
        %v1174 = vadd.f32 %v1153, 1.0
        %v1175 = vadd.f32 %v1155, 1.0
        %v1176 = vadd.f32 %v1157, 1.0
        %v1177 = vadd.f32 %v1159, 1.0
        %v1178 = vadd.f32 %v1161, 1.0
        %v1179 = vadd.f32 %v1163, 1.0
        %v1180 = vadd.f32 %v1165, 1.0
        %v1181 = vadd.f32 %v1167, 1.0
        %v1182 = vadd.f32 %v1169, 1.0
        %v1183 = vadd.f32 %v1171, 1.0
        %v1184 = vmul.f32 %v1172, %v1172
        %v1185 = vmul.f32 %v1173, %v1173
        %v1186 = vmul.f32 %v1174, %v1174
        %v1187 = vmul.f32 %v1175, %v1175
        %v1188 = vmul.f32 %v1176, %v1176
        %v1189 = vmul.f32 %v1177, %v1177
        %v1190 = vmul.f32 %v1178, %v1178
        %v1191 = vmul.f32 %v1179, %v1179
        %v1192 = vmul.f32 %v1180, %v1180
        %v1193 = vmul.f32 %v1181, %v1181
        %v1194 = vmul.f32 %v1182, %v1182
        %v1195 = vmul.f32 %v1183, %v1183
        %v1196 = vadd.f32 %v1184, 1.0
        %v1197 = vadd.f32 %v1185, 1.0
        %v1198 = vadd.f32 %v1186, 1.0
        %v1199 = vadd.f32 %v1187, 1.0
        %v1200 = vadd.f32 %v1188, 1.0
        %v1201 = vadd.f32 %v1189, 1.0
        %v1202 = vadd.f32 %v1190, 1.0
        %v1203 = vadd.f32 %v1191, 1.0
        %v1204 = vadd.f32 %v1192, 1.0
        %v1205 = vadd.f32 %v1193, 1.0
        %v1206 = vadd.f32 %v1194, 1.0
        %v1207 = vadd.f32 %v1195, 1.0
        %v1208 = vrcp.pop %v1196
        %v1209 = vrcp.pop %v1197
        %v1210 = vrcp.pop %v1198
        %v1211 = vrcp.pop %v1199
        %v1212 = vrcp.pop %v1200
        %v1213 = vrcp.pop %v1201
        %v1214 = vrcp.pop %v1202
        %v1215 = vrcp.pop %v1203
        %v1216 = vrcp.pop %v1204
        %v1217 = vrcp.pop %v1205
        %v1218 = vrcp.pop %v1206
        %v1219 = vrcp.pop %v1207
        %v1220 = vmul.f32 %v1208, 2.0
        %v1221 = vmul.f32 %v1209, 2.0
        %v1222 = vmul.f32 %v1210, 2.0
        %v1223 = vmul.f32 %v1211, 2.0
        %v1224 = vmul.f32 %v1212, 2.0
        %v1225 = vmul.f32 %v1213, 2.0
        %v1226 = vmul.f32 %v1214, 2.0
        %v1227 = vmul.f32 %v1215, 2.0
        %v1228 = vmul.f32 %v1216, 2.0
        %v1229 = vmul.f32 %v1217, 2.0
        %v1230 = vmul.f32 %v1218, 2.0
        %v1231 = vmul.f32 %v1219, 2.0
        %v1232 = vsub.f32 1.0, %v1220
        %v1233 = vsub.f32 1.0, %v1221
        %v1234 = vsub.f32 1.0, %v1222
        %v1235 = vsub.f32 1.0, %v1223
        %v1236 = vsub.f32 1.0, %v1224
        %v1237 = vsub.f32 1.0, %v1225
        %v1238 = vsub.f32 1.0, %v1226
        %v1239 = vsub.f32 1.0, %v1227
        %v1240 = vsub.f32 1.0, %v1228
        %v1241 = vsub.f32 1.0, %v1229
        %v1242 = vsub.f32 1.0, %v1230
        %v1243 = vsub.f32 1.0, %v1231
        %v1244 = vmul.f32 %v1108, %v1232
        %v1245 = vmul.f32 %v1110, %v1233
        %v1246 = vmul.f32 %v1112, %v1234
        %v1247 = vmul.f32 %v1114, %v1235
        %v1248 = vmul.f32 %v1118, %v1236
        %v1249 = vmul.f32 %v1120, %v1237
        %v1250 = vmul.f32 %v1122, %v1238
        %v1251 = vmul.f32 %v1124, %v1239
        %v1252 = vmul.f32 %v1128, %v1240
        %v1253 = vmul.f32 %v1130, %v1241
        %v1254 = vmul.f32 %v1132, %v1242
        %v1255 = vmul.f32 %v1134, %v1243
        %v1256 = vadd.f32 %v1244, %v987
        %v1257 = vadd.f32 %v1245, %v988
        %v1258 = vadd.f32 %v1246, %v989
        %v1259 = vadd.f32 %v1247, %v990
        %v1260 = vadd.f32 %v1248, %v991
        %v1261 = vadd.f32 %v1249, %v992
        %v1262 = vadd.f32 %v1250, %v993
        %v1263 = vadd.f32 %v1251, %v994
        %v1264 = vadd.f32 %v1252, %v995
        %v1265 = vadd.f32 %v1253, %v996
        %v1266 = vadd.f32 %v1254, %v997
        %v1267 = vadd.f32 %v1255, %v998
        %s1268 = scalar_lea.vmem %s3, 72
        %v1269 = vld [vmem:[%s1268] sm:$0xf]
        %v1270 = vld [vmem:[%s1268 + $0x4] sm:$0xf]
        %v1271 = vld [vmem:[%s1268 + $0x8] sm:$0xf]
        %v1272 = vld [vmem:[%s1268 + $0xc] sm:$0xf]
        %v1273 = vld [vmem:[%s1268 + $0x10] sm:$0xf]
        %v1274 = vld [vmem:[%s1268 + $0x14] sm:$0xf]
        %v1275 = vpack.c.bf16 %v1258, %v1256
        %v1276 = vpack.c.bf16 %v1259, %v1257
        %v1277 = vpack.c.bf16 %v1262, %v1260
        %v1278 = vpack.c.bf16 %v1263, %v1261
        %v1279 = vpack.c.bf16 %v1266, %v1264
        %v1280 = vpack.c.bf16 %v1267, %v1265
        %s1281 = scalar_lea.vmem %s4, 144
        %v1282 = vld [vmem:[%s1281] sm:$0xff]
        %v1283 = vld [vmem:[%s1281 + $0x8] sm:$0xff]
        %v1284 = vld [vmem:[%s1281 + $0x10] sm:$0xff]
        %v1285 = vld [vmem:[%s1281 + $0x18] sm:$0xff]
        %v1286 = vld [vmem:[%s1281 + $0x20] sm:$0xff]
        %v1287 = vld [vmem:[%s1281 + $0x28] sm:$0xff]
        %1289 = vset.pattern.permute.xlu0 0
        %1290 = vperm.xlu0 %1289, %v1282
        %v1291 = vpop.permute.xlu0 %1290
        %1294 = vset.pattern.permute.xlu0 0
        %1295 = vperm.xlu0 %1294, %v1283
        %v1296 = vpop.permute.xlu0 %1295
        %1299 = vset.pattern.permute.xlu0 0
        %1300 = vperm.xlu0 %1299, %v1284
        %v1301 = vpop.permute.xlu0 %1300
        %1304 = vset.pattern.permute.xlu0 0
        %1305 = vperm.xlu0 %1304, %v1285
        %v1306 = vpop.permute.xlu0 %1305
        %1309 = vset.pattern.permute.xlu0 0
        %1310 = vperm.xlu0 %1309, %v1286
        %v1311 = vpop.permute.xlu0 %1310
        %1314 = vset.pattern.permute.xlu0 0
        %1315 = vperm.xlu0 %1314, %v1287
        %v1316 = vpop.permute.xlu0 %1315
        %v1324 = vunpack.c.l.b16 %v1269
        %v1325 = vunpack.c.l.b16 %v1270
        %v1326 = vunpack.c.l.b16 %v1271
        %v1327 = vunpack.c.l.b16 %v1272
        %v1328 = vunpack.c.l.b16 %v1273
        %v1329 = vunpack.c.l.b16 %v1274
        %v1330 = vpack.c.b16 %v1325, %v1324
        %v1331 = vpack.c.b16 %v1327, %v1326
        %v1332 = vpack.c.b16 %v1329, %v1328
        %v1334 = vsel %vm525, %v1330, 0
        %v1337 = vsel %vm525, %v1331, 0
        %v1340 = vsel %vm525, %v1332, 0
        %1342 = vmatprep.subr.bf16.mxu0 0
        %1343 = vmatpush1.bf16.msra.mxu0 0
        %1344 = vmatprep.subr.bf16.mxu0 0
        %1345 = vmatpush1.bf16.msra.mxu0 0
        %1346 = vmatprep.subr.bf16.mxu0 0
        %1347 = vmatpush1.bf16.msra.mxu0 0
        %1348 = vmatprep.subr.bf16.mxu0 0
        %1349 = vmatpush1.bf16.msra.mxu0 0
        %1350 = vmatprep.subr.bf16.mxu0 0
        %1351 = vmatpush1.bf16.msra.mxu0 0
        %1352 = vmatprep.subr.bf16.mxu0 %v1280
        %1353 = vmatpush1.bf16.msra.mxu0 %v1279
        %1354 = vmatprep.subr.bf16.mxu0 %v1278
        %1355 = vmatpush1.bf16.msra.mxu0 %v1277
        %1356 = vmatprep.subr.bf16.mxu0 %v1276
        %1357 = vmatpush1.bf16.msra.mxu0 %v1275
        %1358 = vmatprep.subr.bf16.mxu0 0
        %1359 = vmatpush2.bf16.msra.mxu0 0
        %1360 = vmatprep.subr.bf16.mxu0 0
        %1361 = vmatpush2.bf16.msra.mxu0 0
        %1362 = vmatprep.subr.bf16.mxu0 0
        %1363 = vmatpush2.bf16.msra.mxu0 0
        %1364 = vmatprep.subr.bf16.mxu0 0
        %1365 = vmatpush2.bf16.msra.mxu0 0
        %1366 = vmatprep.subr.bf16.mxu0 0
        %1367 = vmatpush2.bf16.msra.mxu0 0
        %1368 = vmatprep.subr.bf16.mxu0 0
        %1369 = vmatpush2.bf16.msra.mxu0 0
        %1370 = vmatprep.subr.bf16.mxu0 0
        %1371 = vmatpush2.bf16.msra.mxu0 0
        %1372 = vmatprep.subr.bf16.mxu0 0
        %1373 = vmatpush2.bf16.msra.mxu0 0
        %1374 = vmatprep.mubr.bf16.mxu0 0
        %1375 = vmatmul.mubr.bf16.gmra.mxu0 %v1334
        %v1376 = vpop.f32.mrf.mxu0
        %v1377 = vadd.f32 %v1291, %v1376
        %v1378 = vpop.f32.mrf.mxu0
        %v1379 = vadd.f32 %v1291, %v1378
        %v1380 = vpop.f32.mrf.mxu0
        %v1381 = vadd.f32 %v1296, %v1380
        %v1382 = vpop.f32.mrf.mxu0
        %v1383 = vadd.f32 %v1296, %v1382
        %1384 = vmatprep.mubr.bf16.mxu0 0
        %1385 = vmatmul.mubr.bf16.gmra.mxu0 %v1337
        %v1386 = vpop.f32.mrf.mxu0
        %v1387 = vadd.f32 %v1301, %v1386
        %v1388 = vpop.f32.mrf.mxu0
        %v1389 = vadd.f32 %v1301, %v1388
        %v1390 = vpop.f32.mrf.mxu0
        %v1391 = vadd.f32 %v1306, %v1390
        %v1392 = vpop.f32.mrf.mxu0
        %v1393 = vadd.f32 %v1306, %v1392
        %1394 = vmatprep.mubr.bf16.mxu0 0
        %1395 = vmatmul.mubr.bf16.gmra.mxu0 %v1340
        %v1396 = vpop.f32.mrf.mxu0
        %v1397 = vadd.f32 %v1311, %v1396
        %v1398 = vpop.f32.mrf.mxu0
        %v1399 = vadd.f32 %v1311, %v1398
        %v1400 = vpop.f32.mrf.mxu0
        %v1401 = vadd.f32 %v1316, %v1400
        %v1402 = vpop.f32.mrf.mxu0
        %v1403 = vadd.f32 %v1316, %v1402
        %1404 = vdwg.mxu0
        %v1405 = vmin.f32 %v1377, 20.0
        %v1406 = vmin.f32 %v1379, 20.0
        %v1407 = vmin.f32 %v1381, 20.0
        %v1408 = vmin.f32 %v1383, 20.0
        %v1409 = vmin.f32 %v1387, 20.0
        %v1410 = vmin.f32 %v1389, 20.0
        %v1411 = vmin.f32 %v1391, 20.0
        %v1412 = vmin.f32 %v1393, 20.0
        %v1413 = vmin.f32 %v1397, 20.0
        %v1414 = vmin.f32 %v1399, 20.0
        %v1415 = vmin.f32 %v1401, 20.0
        %v1416 = vmin.f32 %v1403, 20.0
        %v1417 = vmul.f32 %v1405, 1.442695
        %v1418 = vpow.pop %v1417
        %v1419 = vmul.f32 %v1406, 1.442695
        %v1420 = vpow.pop %v1419
        %v1421 = vmul.f32 %v1407, 1.442695
        %v1422 = vpow.pop %v1421
        %v1423 = vmul.f32 %v1408, 1.442695
        %v1424 = vpow.pop %v1423
        %v1425 = vmul.f32 %v1409, 1.442695
        %v1426 = vpow.pop %v1425
        %v1427 = vmul.f32 %v1410, 1.442695
        %v1428 = vpow.pop %v1427
        %v1429 = vmul.f32 %v1411, 1.442695
        %v1430 = vpow.pop %v1429
        %v1431 = vmul.f32 %v1412, 1.442695
        %v1432 = vpow.pop %v1431
        %v1433 = vmul.f32 %v1413, 1.442695
        %v1434 = vpow.pop %v1433
        %v1435 = vmul.f32 %v1414, 1.442695
        %v1436 = vpow.pop %v1435
        %v1437 = vmul.f32 %v1415, 1.442695
        %v1438 = vpow.pop %v1437
        %v1439 = vmul.f32 %v1416, 1.442695
        %v1440 = vpow.pop %v1439
        %v1441 = vadd.f32 %v1418, 1.0
        %v1442 = vadd.f32 %v1420, 1.0
        %v1443 = vadd.f32 %v1422, 1.0
        %v1444 = vadd.f32 %v1424, 1.0
        %v1445 = vadd.f32 %v1426, 1.0
        %v1446 = vadd.f32 %v1428, 1.0
        %v1447 = vadd.f32 %v1430, 1.0
        %v1448 = vadd.f32 %v1432, 1.0
        %v1449 = vadd.f32 %v1434, 1.0
        %v1450 = vadd.f32 %v1436, 1.0
        %v1451 = vadd.f32 %v1438, 1.0
        %v1452 = vadd.f32 %v1440, 1.0
        %v1453 = vmul.f32 %v1441, %v1441
        %v1454 = vmul.f32 %v1442, %v1442
        %v1455 = vmul.f32 %v1443, %v1443
        %v1456 = vmul.f32 %v1444, %v1444
        %v1457 = vmul.f32 %v1445, %v1445
        %v1458 = vmul.f32 %v1446, %v1446
        %v1459 = vmul.f32 %v1447, %v1447
        %v1460 = vmul.f32 %v1448, %v1448
        %v1461 = vmul.f32 %v1449, %v1449
        %v1462 = vmul.f32 %v1450, %v1450
        %v1463 = vmul.f32 %v1451, %v1451
        %v1464 = vmul.f32 %v1452, %v1452
        %v1465 = vadd.f32 %v1453, 1.0
        %v1466 = vadd.f32 %v1454, 1.0
        %v1467 = vadd.f32 %v1455, 1.0
        %v1468 = vadd.f32 %v1456, 1.0
        %v1469 = vadd.f32 %v1457, 1.0
        %v1470 = vadd.f32 %v1458, 1.0
        %v1471 = vadd.f32 %v1459, 1.0
        %v1472 = vadd.f32 %v1460, 1.0
        %v1473 = vadd.f32 %v1461, 1.0
        %v1474 = vadd.f32 %v1462, 1.0
        %v1475 = vadd.f32 %v1463, 1.0
        %v1476 = vadd.f32 %v1464, 1.0
        %v1477 = vrcp.pop %v1465
        %v1478 = vrcp.pop %v1466
        %v1479 = vrcp.pop %v1467
        %v1480 = vrcp.pop %v1468
        %v1481 = vrcp.pop %v1469
        %v1482 = vrcp.pop %v1470
        %v1483 = vrcp.pop %v1471
        %v1484 = vrcp.pop %v1472
        %v1485 = vrcp.pop %v1473
        %v1486 = vrcp.pop %v1474
        %v1487 = vrcp.pop %v1475
        %v1488 = vrcp.pop %v1476
        %v1489 = vmul.f32 %v1477, 2.0
        %v1490 = vmul.f32 %v1478, 2.0
        %v1491 = vmul.f32 %v1479, 2.0
        %v1492 = vmul.f32 %v1480, 2.0
        %v1493 = vmul.f32 %v1481, 2.0
        %v1494 = vmul.f32 %v1482, 2.0
        %v1495 = vmul.f32 %v1483, 2.0
        %v1496 = vmul.f32 %v1484, 2.0
        %v1497 = vmul.f32 %v1485, 2.0
        %v1498 = vmul.f32 %v1486, 2.0
        %v1499 = vmul.f32 %v1487, 2.0
        %v1500 = vmul.f32 %v1488, 2.0
        %v1501 = vsub.f32 1.0, %v1489
        %v1502 = vsub.f32 1.0, %v1490
        %v1503 = vsub.f32 1.0, %v1491
        %v1504 = vsub.f32 1.0, %v1492
        %v1505 = vsub.f32 1.0, %v1493
        %v1506 = vsub.f32 1.0, %v1494
        %v1507 = vsub.f32 1.0, %v1495
        %v1508 = vsub.f32 1.0, %v1496
        %v1509 = vsub.f32 1.0, %v1497
        %v1510 = vsub.f32 1.0, %v1498
        %v1511 = vsub.f32 1.0, %v1499
        %v1512 = vsub.f32 1.0, %v1500
        %v1513 = vmul.f32 %v1377, %v1501
        %v1514 = vmul.f32 %v1379, %v1502
        %v1515 = vmul.f32 %v1381, %v1503
        %v1516 = vmul.f32 %v1383, %v1504
        %v1517 = vmul.f32 %v1387, %v1505
        %v1518 = vmul.f32 %v1389, %v1506
        %v1519 = vmul.f32 %v1391, %v1507
        %v1520 = vmul.f32 %v1393, %v1508
        %v1521 = vmul.f32 %v1397, %v1509
        %v1522 = vmul.f32 %v1399, %v1510
        %v1523 = vmul.f32 %v1401, %v1511
        %v1524 = vmul.f32 %v1403, %v1512
        %v1525 = vadd.f32 %v1513, %v1256
        %v1526 = vadd.f32 %v1514, %v1257
        %v1527 = vadd.f32 %v1515, %v1258
        %v1528 = vadd.f32 %v1516, %v1259
        %v1529 = vadd.f32 %v1517, %v1260
        %v1530 = vadd.f32 %v1518, %v1261
        %v1531 = vadd.f32 %v1519, %v1262
        %v1532 = vadd.f32 %v1520, %v1263
        %v1533 = vadd.f32 %v1521, %v1264
        %v1534 = vadd.f32 %v1522, %v1265
        %v1535 = vadd.f32 %v1523, %v1266
        %v1536 = vadd.f32 %v1524, %v1267
        %v1537 = vld [vmem:[%s5] sm:$0xf]
        %v1538 = vpack.c.bf16 %v1527, %v1525
        %v1539 = vpack.c.bf16 %v1528, %v1526
        %v1540 = vpack.c.bf16 %v1531, %v1529
        %v1541 = vpack.c.bf16 %v1532, %v1530
        %v1542 = vpack.c.bf16 %v1535, %v1533
        %v1543 = vpack.c.bf16 %v1536, %v1534
        %v1544 = vld [vmem:[%s6] sm:$0xff]
        %1546 = vset.pattern.permute.xlu0 0
        %1547 = vperm.xlu0 %1546, %v1544
        %v1548 = vpop.permute.xlu0 %1547
        %v1551 = vsel %vm525, %v1537, 0
        %1553 = vmatprep.subr.bf16.mxu0 0
        %1554 = vmatpush1.bf16.msra.mxu0 0
        %1555 = vmatprep.subr.bf16.mxu0 0
        %1556 = vmatpush1.bf16.msra.mxu0 0
        %1557 = vmatprep.subr.bf16.mxu0 0
        %1558 = vmatpush1.bf16.msra.mxu0 0
        %1559 = vmatprep.subr.bf16.mxu0 0
        %1560 = vmatpush1.bf16.msra.mxu0 0
        %1561 = vmatprep.subr.bf16.mxu0 0
        %1562 = vmatpush1.bf16.msra.mxu0 0
        %1563 = vmatprep.subr.bf16.mxu0 %v1543
        %1564 = vmatpush1.bf16.msra.mxu0 %v1542
        %1565 = vmatprep.subr.bf16.mxu0 %v1541
        %1566 = vmatpush1.bf16.msra.mxu0 %v1540
        %1567 = vmatprep.subr.bf16.mxu0 %v1539
        %1568 = vmatpush1.bf16.msra.mxu0 %v1538
        %1569 = vmatprep.subr.bf16.mxu0 0
        %1570 = vmatpush2.bf16.msra.mxu0 0
        %1571 = vmatprep.subr.bf16.mxu0 0
        %1572 = vmatpush2.bf16.msra.mxu0 0
        %1573 = vmatprep.subr.bf16.mxu0 0
        %1574 = vmatpush2.bf16.msra.mxu0 0
        %1575 = vmatprep.subr.bf16.mxu0 0
        %1576 = vmatpush2.bf16.msra.mxu0 0
        %1577 = vmatprep.subr.bf16.mxu0 0
        %1578 = vmatpush2.bf16.msra.mxu0 0
        %1579 = vmatprep.subr.bf16.mxu0 0
        %1580 = vmatpush2.bf16.msra.mxu0 0
        %1581 = vmatprep.subr.bf16.mxu0 0
        %1582 = vmatpush2.bf16.msra.mxu0 0
        %1583 = vmatprep.subr.bf16.mxu0 0
        %1584 = vmatpush2.bf16.msra.mxu0 0
        %1585 = vmatprep.mubr.bf16.mxu0 0
        %1586 = vmatmul.mubr.bf16.gmra.mxu0 %v1551
        %v1587 = vpop.f32.mrf.mxu0
        %v1588 = vadd.f32 %v1548, %v1587
        %v1589 = vpop.f32.mrf.mxu0
        %v1590 = vadd.f32 %v1548, %v1589
        %v1591 = vpop.f32.mrf.mxu0
        %v1592 = vpop.f32.mrf.mxu0
        %1593 = vdwg.mxu0
        %1594 = vst [vmem:[%s316] sm:$0xff] %v1588
        %1595 = vst [vmem:[%s316 + $0x8] sm:$0xff] %v1590
        %s1596 = sand.u32 %s181, 1
        %s1597 = scalar_lea.sflag [#allocation4], %s1596
        %s1598 = sand.u32 %s181, 1
        %s1599 = smul.addr %s1598, 16
        %s1600 = scalar_lea.vmem [#allocation3], %s1599
        // Predicated region
        $region87: #{tpu_custom_call.1} parent=81 // pred_check
          %p1601 = pneg %p191
        $region88: #{tpu_custom_call.1} parent=81 // pred_check_branch
          %1603 = sbr.rel (%p1601) target = $region90
        $region89: #{tpu_custom_call.1} parent=81 // pred_region
          %s1604 = smul.u32 2, %s21
          %s1606 = ssub.s32 256, 256
          %1607 = vsyncadd %s1597, %s1606
          %s1608 = smul.addr %s1604, 128
          %s1609 = scalar_lea.hbm %s7, %s1608
          %s1611 = sshll.u32 %s1600, 4
          %s1612 = int_to_ptr.vmem [resolvable:$true] %s1611
          %1614 = dma.vmem_to_hbm [thread:$0]  %s1612, 256, %s1609, %s1597
        $region90: #{tpu_custom_call.1} parent=81 // pred_fallthru
          _
      $region82: #{tpu_custom_call.1} parent=5 // pred_fallthru
        _
      %p1615 = scmp.le.s32.totalorder 2, %s16
      // Predicated region
      $region91: #{tpu_custom_call.1} parent=5 // pred_check
        %p1616 = pneg %p1615
      $region92: #{tpu_custom_call.1} parent=5 // pred_check_branch
        %1618 = sbr.rel (%p1616) target = $region94
      $region93: #{tpu_custom_call.1} parent=5 // pred_region
        %s1619 = ssub.s32 %s16, 2
        // Predicated region
        $region95: #{tpu_custom_call.1} parent=93 // pred_check
          %p1620 = pneg %p197
        $region96: #{tpu_custom_call.1} parent=93 // pred_check_branch
          %1622 = sbr.rel (%p1620) target = $region98
        $region97: #{tpu_custom_call.1} parent=93 // pred_region
          %s1623 = sand.u32 %s182, 1
          %s1624 = scalar_lea.sflag [#allocation4], %s1623
          %s1625 = sand.u32 %s182, 1
          %s1626 = smul.addr %s1625, 16
          %s1627 = scalar_lea.vmem [#allocation3], %s1626
          %1628 = dma.done %s1624, 256
        $region98: #{tpu_custom_call.1} parent=93 // pred_fallthru
          _
      $region94: #{tpu_custom_call.1} parent=5 // pred_fallthru
        _
    $region6: #{tpu_custom_call.1} parent=1 // loop_footer
      %s20 = sadd.s32 1, %s16
    $region7: #{tpu_custom_call.1} parent=1 // loop_footer_branch
      %15 = sbr.rel target = $region3
    $region8: #{tpu_custom_call.1} parent=1 // loop_exit
      _
    %1629 = vsyncpa [#allocation4], 1
    %s1630 = scalar_lea.sflag [#allocation4], 1
    %1631 = vsyncpa %s1630, 1

</llo_original>
